<compile_context>
chip_gen: v7x
topology: tpu7x:2x2x1
jax: 0.10.0
libtpu: 0.0.40
codegen_flags: <defaults>
</compile_context>

<pallas_src>
import jax
import jax.numpy as jnp
from jax.experimental import pallas as pl
from jax.experimental.pallas import tpu as pltpu


def _round_up(n, m):
    return ((n + m - 1) // m) * m


def _sigmoid(x):
    # exp on the EUP, approximate reciprocal also on the EUP -> no VALU divide.
    return pl.reciprocal(1.0 + jnp.exp(-x), approx=True)


def mlp_kernel(x_ref, w1_ref, b1_ref, w2_ref, b2_ref, w3r_ref, b3_ref, o_ref):
    x = x_ref[...]                                                    # [TILE_B, 784]
    h1 = _sigmoid(
        jnp.dot(x, w1_ref[...], preferred_element_type=jnp.float32)
        + b1_ref[...]                                                 # [1, 32] broadcast
    )                                                                 # [TILE_B, 32]
    h2 = _sigmoid(
        jnp.dot(h1, w2_ref[...], preferred_element_type=jnp.float32)
        + b2_ref[...]                                                 # [1, 64] broadcast
    )                                                                 # [TILE_B, 64]
    # Third layer has output width 1 -> do it as a lane reduction instead of an MXU op.
    logits = jnp.sum(h2 * w3r_ref[...], axis=-1, keepdims=True) + b3_ref[...]
    o_ref[...] = _sigmoid(logits).astype(o_ref.dtype)                 # [TILE_B, 1]


def neural_net_forward(x, params, *, tile_b=1024):
    """x: [B, 784] float32. params: dict of W1,b1,W2,b2,W3,b3 (torch.nn.Linear layout)."""
    B, F = x.shape
    w1, b1 = params["W1"], params["b1"]
    w2, b2 = params["W2"], params["b2"]
    w3, b3 = params["W3"], params["b3"]
    w3_row = w3.reshape(1, w3.shape[0])          # (64, 1) -> (1, 64), free reshape in XLA

    # Batch tile: multiple of 8 (sublane), capped so tiny batches become a single tile.
    tile_b = min(tile_b, max(8, _round_up(B, 8)))
    tile_b = _round_up(tile_b, 8)
    b_pad = _round_up(B, tile_b)
    if b_pad != B:
        x = jnp.pad(x, ((0, b_pad - B), (0, 0)))

    grid = (b_pad // tile_b,)
    resident = lambda a: pl.BlockSpec(a.shape, lambda i: (0,) * a.ndim)

    out = pl.pallas_call(
        mlp_kernel,
        out_shape=jax.ShapeDtypeStruct((b_pad, 1), jnp.float32),
        grid=grid,
        in_specs=[
            pl.BlockSpec((tile_b, F), lambda i: (i, 0)),   # stream x over the batch
            resident(w1), resident(b1),                    # weights/biases loaded once
            resident(w2), resident(b2),
            resident(w3_row), resident(b3),
        ],
        out_specs=pl.BlockSpec((tile_b, 1), lambda i: (i, 0)),
        compiler_params=pltpu.CompilerParams(
            dimension_semantics=("parallel",),             # megacore split on v7x
            vmem_limit_bytes=64 << 20,
        ),
    )(x, w1, b1, w2, b2, w3_row, b3)
    return out[:B]


def init_params(key):
    """Deterministic init mirroring torch.nn.Linear (uniform +/- 1/sqrt(fan_in))."""
    def linear(key, fan_in, fan_out):
        kw, kb = jax.random.split(key)
        bound = 1.0 / jnp.sqrt(fan_in)
        w = jax.random.uniform(kw, (fan_in, fan_out), jnp.float32, -bound, bound)
        b = jax.random.uniform(kb, (1, fan_out), jnp.float32, -bound, bound)
        return w, b

    k1, k2, k3 = jax.random.split(key, 3)
    w1, b1 = linear(k1, 28 ** 2, 32)
    w2, b2 = linear(k2, 32, 64)
    w3, b3 = linear(k3, 64, 1)
    return {"W1": w1, "b1": b1, "W2": w2, "b2": b2, "W3": w3.reshape(64, 1), "b3": b3}


if __name__ == "__main__":
    key = jax.random.PRNGKey(0)
    k_params, k_x = jax.random.split(key)
    params = init_params(k_params)

    # Small batch; non-multiple of the tile so padding + a multi-step grid are exercised.
    B = 300
    x = jax.random.normal(k_x, (B, 28 ** 2), jnp.float32)

    out = neural_net_forward(x, params, tile_b=128)   # grid = (3,)
    jax.block_until_ready(out)

    # Sanity check against pure-JAX reference of the same math.
    def ref(x, p):
        h1 = jax.nn.sigmoid(x @ p["W1"] + p["b1"])
        h2 = jax.nn.sigmoid(h1 @ p["W2"] + p["b2"])
        return jax.nn.sigmoid(h2 @ p["W3"] + p["b3"])

    expected = ref(x, params)
    assert out.shape == (B, 1)
    # Tolerance loosened slightly: sigmoid uses the EUP approximate reciprocal in-kernel.
    assert jnp.allclose(out, expected, atol=2e-3, rtol=2e-3)

    print("KERNEL_OK")
</pallas_src>

<mosaic_0001>
module attributes {stable_mosaic.version = 11 : i64} {
  func.func @mlp_kernel(%arg0: i32, %arg1: memref<128x784xf32, #tpu.memory_space<vmem>>, %arg2: memref<784x32xf32, #tpu.memory_space<vmem>>, %arg3: memref<1x32xf32, #tpu.memory_space<vmem>>, %arg4: memref<32x64xf32, #tpu.memory_space<vmem>>, %arg5: memref<1x64xf32, #tpu.memory_space<vmem>>, %arg6: memref<1x64xf32, #tpu.memory_space<vmem>>, %arg7: memref<1x1xf32, #tpu.memory_space<vmem>>, %arg8: memref<128x1xf32, #tpu.memory_space<vmem>>) attributes {dimension_semantics = [#tpu.dimension_semantics<parallel>], iteration_bounds = array<i64: 3>, scalar_prefetch = 0 : i64, scratch_operands = 0 : i64, tpu.core_type = #tpu.core_type<tc>, window_params = [{transform_indices = @transform_0, window_bounds = array<i64: 128, 784>}, {pipeline_mode = #tpu.pipeline_mode<synchronous>, transform_indices = @transform_1, window_bounds = array<i64: 784, 32>}, {pipeline_mode = #tpu.pipeline_mode<synchronous>, transform_indices = @transform_2, window_bounds = array<i64: 1, 32>}, {pipeline_mode = #tpu.pipeline_mode<synchronous>, transform_indices = @transform_3, window_bounds = array<i64: 32, 64>}, {pipeline_mode = #tpu.pipeline_mode<synchronous>, transform_indices = @transform_4, window_bounds = array<i64: 1, 64>}, {pipeline_mode = #tpu.pipeline_mode<synchronous>, transform_indices = @transform_5, window_bounds = array<i64: 1, 64>}, {pipeline_mode = #tpu.pipeline_mode<synchronous>, transform_indices = @transform_6, window_bounds = array<i64: 1, 1>}, {transform_indices = @transform_7, window_bounds = array<i64: 128, 1>}]} {
    %c0 = arith.constant 0 : index
    %c0_0 = arith.constant 0 : index
    %0 = vector.load %arg1[%c0, %c0_0] : memref<128x784xf32, #tpu.memory_space<vmem>>, vector<128x784xf32>
    %c0_1 = arith.constant 0 : index
    %c0_2 = arith.constant 0 : index
    %1 = vector.load %arg2[%c0_1, %c0_2] : memref<784x32xf32, #tpu.memory_space<vmem>>, vector<784x32xf32>
    %cst = arith.constant dense<0.000000e+00> : vector<128x32xf32>
    %2 = tpu.matmul %0, %1, %cst {dimension_numbers = #tpu.dot_dimension_numbers<[1], [0], [0], [1], [0, 0, 1, 1], [], []>} : vector<128x784xf32>, vector<784x32xf32>, vector<128x32xf32> -> vector<128x32xf32>
    %c0_3 = arith.constant 0 : index
    %c0_4 = arith.constant 0 : index
    %3 = vector.load %arg3[%c0_3, %c0_4] : memref<1x32xf32, #tpu.memory_space<vmem>>, vector<1x32xf32>
    %4 = vector.broadcast %3 : vector<1x32xf32> to vector<128x32xf32>
    %5 = arith.addf %2, %4 : vector<128x32xf32>
    %cst_5 = arith.constant 0.000000e+00 : f32
    %6 = vector.broadcast %cst_5 : f32 to vector<128x32xf32>
    %7 = arith.subf %6, %5 : vector<128x32xf32>
    %8 = math.exp %7 : vector<128x32xf32>
    %cst_6 = arith.constant 1.000000e+00 : f32
    %9 = vector.broadcast %cst_6 : f32 to vector<128x32xf32>
    %10 = arith.addf %9, %8 : vector<128x32xf32>
    %11 = tpu.reciprocal %10 {approx = true} : vector<128x32xf32> -> vector<128x32xf32>
    %c0_7 = arith.constant 0 : index
    %c0_8 = arith.constant 0 : index
    %12 = vector.load %arg4[%c0_7, %c0_8] : memref<32x64xf32, #tpu.memory_space<vmem>>, vector<32x64xf32>
    %cst_9 = arith.constant dense<0.000000e+00> : vector<128x64xf32>
    %13 = tpu.matmul %11, %12, %cst_9 {dimension_numbers = #tpu.dot_dimension_numbers<[1], [0], [0], [1], [0, 0, 1, 1], [], []>} : vector<128x32xf32>, vector<32x64xf32>, vector<128x64xf32> -> vector<128x64xf32>
    %c0_10 = arith.constant 0 : index
    %c0_11 = arith.constant 0 : index
    %14 = vector.load %arg5[%c0_10, %c0_11] : memref<1x64xf32, #tpu.memory_space<vmem>>, vector<1x64xf32>
    %15 = vector.broadcast %14 : vector<1x64xf32> to vector<128x64xf32>
    %16 = arith.addf %13, %15 : vector<128x64xf32>
    %cst_12 = arith.constant 0.000000e+00 : f32
    %17 = vector.broadcast %cst_12 : f32 to vector<128x64xf32>
    %18 = arith.subf %17, %16 : vector<128x64xf32>
    %19 = math.exp %18 : vector<128x64xf32>
    %cst_13 = arith.constant 1.000000e+00 : f32
    %20 = vector.broadcast %cst_13 : f32 to vector<128x64xf32>
    %21 = arith.addf %20, %19 : vector<128x64xf32>
    %22 = tpu.reciprocal %21 {approx = true} : vector<128x64xf32> -> vector<128x64xf32>
    %c0_14 = arith.constant 0 : index
    %c0_15 = arith.constant 0 : index
    %23 = vector.load %arg6[%c0_14, %c0_15] : memref<1x64xf32, #tpu.memory_space<vmem>>, vector<1x64xf32>
    %24 = vector.broadcast %23 : vector<1x64xf32> to vector<128x64xf32>
    %25 = arith.mulf %22, %24 : vector<128x64xf32>
    %cst_16 = arith.constant dense<0.000000e+00> : vector<128xf32>
    %26 = vector.multi_reduction <add>, %25, %cst_16 [1] : vector<128x64xf32> to vector<128xf32>
    %27 = vector.shape_cast %26 : vector<128xf32> to vector<128x1xf32>
    %c0_17 = arith.constant 0 : index
    %c0_18 = arith.constant 0 : index
    %28 = vector.load %arg7[%c0_17, %c0_18] : memref<1x1xf32, #tpu.memory_space<vmem>>, vector<1x1xf32>
    %29 = vector.broadcast %28 : vector<1x1xf32> to vector<128x1xf32>
    %30 = arith.addf %27, %29 : vector<128x1xf32>
    %cst_19 = arith.constant 0.000000e+00 : f32
    %31 = vector.broadcast %cst_19 : f32 to vector<128x1xf32>
    %32 = arith.subf %31, %30 : vector<128x1xf32>
    %33 = math.exp %32 : vector<128x1xf32>
    %cst_20 = arith.constant 1.000000e+00 : f32
    %34 = vector.broadcast %cst_20 : f32 to vector<128x1xf32>
    %35 = arith.addf %34, %33 : vector<128x1xf32>
    %36 = tpu.reciprocal %35 {approx = true} : vector<128x1xf32> -> vector<128x1xf32>
    %c0_21 = arith.constant 0 : index
    %c0_22 = arith.constant 0 : index
    %37 = vector.load %arg8[%c0_21, %c0_22] : memref<128x1xf32, #tpu.memory_space<vmem>>, vector<128x1xf32>
    tpu.vector_store %arg8[%c0_21, %c0_22], %36 {strides = array<i32>} : memref<128x1xf32, #tpu.memory_space<vmem>>, vector<128x1xf32>,
    return
  }
  func.func @transform_0(%arg0: i32) -> (i32, i32) {
    %c0_i32 = arith.constant 0 : i32
    %c0_i32_0 = arith.constant 0 : i32
    return %arg0, %c0_i32 : i32, i32
  }
  func.func @transform_1(%arg0: i32) -> (i32, i32) {
    %c0_i32 = arith.constant 0 : i32
    %c0_i32_0 = arith.constant 0 : i32
    %c0_i32_1 = arith.constant 0 : i32
    return %c0_i32, %c0_i32_0 : i32, i32
  }
  func.func @transform_2(%arg0: i32) -> (i32, i32) {
    %c0_i32 = arith.constant 0 : i32
    %c0_i32_0 = arith.constant 0 : i32
    %c0_i32_1 = arith.constant 0 : i32
    return %c0_i32, %c0_i32_0 : i32, i32
  }
  func.func @transform_3(%arg0: i32) -> (i32, i32) {
    %c0_i32 = arith.constant 0 : i32
    %c0_i32_0 = arith.constant 0 : i32
    %c0_i32_1 = arith.constant 0 : i32
    return %c0_i32, %c0_i32_0 : i32, i32
  }
  func.func @transform_4(%arg0: i32) -> (i32, i32) {
    %c0_i32 = arith.constant 0 : i32
    %c0_i32_0 = arith.constant 0 : i32
    %c0_i32_1 = arith.constant 0 : i32
    return %c0_i32, %c0_i32_0 : i32, i32
  }
  func.func @transform_5(%arg0: i32) -> (i32, i32) {
    %c0_i32 = arith.constant 0 : i32
    %c0_i32_0 = arith.constant 0 : i32
    %c0_i32_1 = arith.constant 0 : i32
    return %c0_i32, %c0_i32_0 : i32, i32
  }
  func.func @transform_6(%arg0: i32) -> (i32, i32) {
    %c0_i32 = arith.constant 0 : i32
    %c0_i32_0 = arith.constant 0 : i32
    %c0_i32_1 = arith.constant 0 : i32
    return %c0_i32, %c0_i32_0 : i32, i32
  }
  func.func @transform_7(%arg0: i32) -> (i32, i32) {
    %c0_i32 = arith.constant 0 : i32
    %c0_i32_0 = arith.constant 0 : i32
    return %arg0, %c0_i32 : i32, i32
  }
}

</mosaic_0001>

<llo_original>
// kernel: tpu_custom_call.1
$region0: #{tpu_custom_call.1}
  #allocation0 [shape = 'u32[]', space=smem, size = 0x4, offset = 0x4, fixed_abs, tag = 'smem constant byte address 0x4 - core index']
  #allocation1 [shape = 'u32[144,128]{1,0:T(1,128)}', space=vmem, size = 0x12000, scoped, tag = 'internal scratch']
  #allocation2 [shape = 'f32[1,1]{1,0:T(1,128)S(1)}', space=vmem, size = 0x200, scoped, tag = 'scoped memory for tpu_custom_call.1']
  %s0 = inlined_call_operand.hbm [shape: f32[384,784], index: 0, kind: input, shape index: {}]
  %s1 = inlined_call_operand.hbm [shape: f32[784,32], index: 1, kind: input, shape index: {}]
  %s2 = inlined_call_operand.hbm [shape: f32[1,32], index: 2, kind: input, shape index: {}]
  %s3 = inlined_call_operand.hbm [shape: f32[32,64], index: 3, kind: input, shape index: {}]
  %s4 = inlined_call_operand.hbm [shape: f32[1,64], index: 4, kind: input, shape index: {}]
  %s5 = inlined_call_operand.hbm [shape: f32[1,64], index: 5, kind: input, shape index: {}]
  %s6 = inlined_call_operand.<no memory space> [shape: f32[1,1], index: 6, kind: input, shape index: {}]
  %s7 = inlined_call_operand.hbm [shape: f32[384,1], index: 7, kind: output, shape index: {}]
  %s8 = sld [smem:[#allocation0]]
  $region85: #{tpu_custom_call.1} parent=0
    _
  %s10 = ssub.s32 1, %s8
  %s11 = scalar_select 0, %s10, %s8
  %v12 = vstv %s6
  %13 = vst [vmem:[#allocation2] sm:$0x1] %v12
  $region1: #{tpu_custom_call.1} parent=0
    #allocation3 [shape = 'u8[917504]{0}', space=vmem, size = 0xe0000, scoped, tag = 'input window, operand 0']
    #allocation4 [shape = 's32[2]{0}', space=sflag, size = 0x8, scoped, tag = 'scoped memory for tpu_custom_call.1']
    #allocation5 [shape = 's32[2]{0}', space=sflag, size = 0x8, scoped, tag = 'scoped memory for tpu_custom_call.1']
    #allocation6 [shape = 'u8[401408]{0}', space=vmem, size = 0x62000, scoped, tag = 'input window, operand 1, single buffered']
    #allocation7 [shape = 's32[1]{0}', space=sflag, size = 0x4, scoped, tag = 'scoped memory for tpu_custom_call.1']
    #allocation8 [shape = 'u8[512]{0}', space=vmem, size = 0x400, scoped, tag = 'input window, operand 2, single buffered']
    #allocation9 [shape = 'u8[16384]{0}', space=vmem, size = 0x4000, scoped, tag = 'input window, operand 3, single buffered']
    #allocation10 [shape = 's32[1]{0}', space=sflag, size = 0x4, scoped, tag = 'scoped memory for tpu_custom_call.1']
    #allocation11 [shape = 'u8[512]{0}', space=vmem, size = 0x400, scoped, tag = 'input window, operand 4, single buffered']
    #allocation12 [shape = 'u8[512]{0}', space=vmem, size = 0x400, scoped, tag = 'input window, operand 5, single buffered']
    #allocation13 [shape = 's32[1]{0}', space=sflag, size = 0x4, scoped, tag = 'scoped memory for tpu_custom_call.1']
    #allocation14 [shape = 'u8[131072]{0}', space=vmem, size = 0x20000, scoped, tag = 'output window, operand 0']
    %14 = vsyncpa [#allocation4], 0
    %s15 = scalar_lea.sflag [#allocation4], 1
    %16 = vsyncpa %s15, 0
    %17 = vsyncpa [#allocation7], 0
    %18 = vsyncpa [#allocation10], 0
    %19 = vsyncpa [#allocation13], 0
    %20 = vsyncpa [#allocation5], 0
    %s21 = scalar_lea.sflag [#allocation5], 1
    %22 = vsyncpa %s21, 0
    loop: start=0, step=1, limit=5
    $region2: #{tpu_custom_call.1} parent=1 // loop_pre_header
      _
    $region3: #{tpu_custom_call.1} parent=1 // loop_header
      %s24 = sphi 0, %s28
      %p25 = scmp.ge.s32.totalorder %s24, 5
      %s34 = sphi 0, %s36
      %s37 = sphi 0, %s34
      %s38 = sphi 0, %s37
      %s54 = sphi 0, %s38
      %s58 = sphi 0, %s58
      %s60 = sphi 0, %s58
      %s61 = sphi 0, %s60
      %s75 = sphi 0, %s61
      %s79 = sphi 0, %s79
      %s81 = sphi 0, %s79
      %s82 = sphi 0, %s81
      %s96 = sphi 0, %s82
      %s100 = sphi 0, %s100
      %s102 = sphi 0, %s100
      %s103 = sphi 0, %s102
      %s117 = sphi 0, %s103
      %s121 = sphi 0, %s121
      %s123 = sphi 0, %s121
      %s124 = sphi 0, %s123
      %s138 = sphi 0, %s124
      %s142 = sphi 0, %s142
      %s144 = sphi 0, %s142
      %s145 = sphi 0, %s144
      %s159 = sphi 0, %s145
      %s163 = sphi 0, %s163
      %s165 = sphi 0, %s163
      %s166 = sphi 0, %s165
      %s180 = sphi 0, %s166
      %s186 = sphi 0, %s188
      %s189 = sphi 0, %s186
      %s190 = sphi 0, %s189
      %s206 = sphi 0, %s190
    $region4: #{tpu_custom_call.1} parent=1 // loop_header_branch
      %27 = sbr.rel (%p25) target = $region8
    $region5: #{tpu_custom_call.1} parent=1 // loop_body
      %s29 = ssub.s32 %s24, 1
      %s30 = ssub.s32 %s24, 2
      %s31 = sadd.s32 %s24, 1
      %s32 = ssub.s32 %s24, %s31
      %p33 = scmp.eq.s32.totalorder %s32, 0
      %s35 = sadd.s32 %s34, 1
      %s36 = scalar_select %p33, %s34, %s35
      %p39 = pneg %p33
      %p40 = scmp.eq.s32.totalorder %s24, 2
      %p41 = por %p39, %p40
      %p42 = scmp.ne.s32.totalorder %s34, %s37
      %p43 = scmp.eq.s32.totalorder %s24, 0
      %p44 = por %p42, %p43
      %p45 = scmp.ne.s32.totalorder %s34, %s37
      %p46 = scmp.eq.s32.totalorder %s29, 2
      %p47 = por %p45, %p46
      %p48 = scmp.ne.s32.totalorder %s37, %s38
      %p49 = scmp.eq.s32.totalorder %s29, 0
      %p50 = por %p48, %p49
      %p51 = scmp.ne.s32.totalorder %s37, %s38
      %p52 = scmp.eq.s32.totalorder %s30, 2
      %p53 = por %p51, %p52
      %p55 = scmp.ne.s32.totalorder %s38, %s54
      %p56 = scmp.eq.s32.totalorder %s30, 0
      %p57 = por %p55, %p56
      %s59 = sadd.s32 %s58, 1
      %p62 = scmp.eq.s32.totalorder %s24, 2
      %p63 = scmp.ne.s32.totalorder %s58, %s60
      %p64 = scmp.eq.s32.totalorder %s24, 0
      %p65 = por %p63, %p64
      %p66 = scmp.ne.s32.totalorder %s58, %s60
      %p67 = scmp.eq.s32.totalorder %s29, 2
      %p68 = por %p66, %p67
      %p69 = scmp.ne.s32.totalorder %s60, %s61
      %p70 = scmp.eq.s32.totalorder %s29, 0
      %p71 = por %p69, %p70
      %p72 = scmp.ne.s32.totalorder %s60, %s61
      %p73 = scmp.eq.s32.totalorder %s30, 2
      %p74 = por %p72, %p73
      %p76 = scmp.ne.s32.totalorder %s61, %s75
      %p77 = scmp.eq.s32.totalorder %s30, 0
      %p78 = por %p76, %p77
      %s80 = sadd.s32 %s79, 1
      %p83 = scmp.eq.s32.totalorder %s24, 2
      %p84 = scmp.ne.s32.totalorder %s79, %s81
      %p85 = scmp.eq.s32.totalorder %s24, 0
      %p86 = por %p84, %p85
      %p87 = scmp.ne.s32.totalorder %s79, %s81
      %p88 = scmp.eq.s32.totalorder %s29, 2
      %p89 = por %p87, %p88
      %p90 = scmp.ne.s32.totalorder %s81, %s82
      %p91 = scmp.eq.s32.totalorder %s29, 0
      %p92 = por %p90, %p91
      %p93 = scmp.ne.s32.totalorder %s81, %s82
      %p94 = scmp.eq.s32.totalorder %s30, 2
      %p95 = por %p93, %p94
      %p97 = scmp.ne.s32.totalorder %s82, %s96
      %p98 = scmp.eq.s32.totalorder %s30, 0
      %p99 = por %p97, %p98
      %s101 = sadd.s32 %s100, 1
      %p104 = scmp.eq.s32.totalorder %s24, 2
      %p105 = scmp.ne.s32.totalorder %s100, %s102
      %p106 = scmp.eq.s32.totalorder %s24, 0
      %p107 = por %p105, %p106
      %p108 = scmp.ne.s32.totalorder %s100, %s102
      %p109 = scmp.eq.s32.totalorder %s29, 2
      %p110 = por %p108, %p109
      %p111 = scmp.ne.s32.totalorder %s102, %s103
      %p112 = scmp.eq.s32.totalorder %s29, 0
      %p113 = por %p111, %p112
      %p114 = scmp.ne.s32.totalorder %s102, %s103
      %p115 = scmp.eq.s32.totalorder %s30, 2
      %p116 = por %p114, %p115
      %p118 = scmp.ne.s32.totalorder %s103, %s117
      %p119 = scmp.eq.s32.totalorder %s30, 0
      %p120 = por %p118, %p119
      %s122 = sadd.s32 %s121, 1
      %p125 = scmp.eq.s32.totalorder %s24, 2
      %p126 = scmp.ne.s32.totalorder %s121, %s123
      %p127 = scmp.eq.s32.totalorder %s24, 0
      %p128 = por %p126, %p127
      %p129 = scmp.ne.s32.totalorder %s121, %s123
      %p130 = scmp.eq.s32.totalorder %s29, 2
      %p131 = por %p129, %p130
      %p132 = scmp.ne.s32.totalorder %s123, %s124
      %p133 = scmp.eq.s32.totalorder %s29, 0
      %p134 = por %p132, %p133
      %p135 = scmp.ne.s32.totalorder %s123, %s124
      %p136 = scmp.eq.s32.totalorder %s30, 2
      %p137 = por %p135, %p136
      %p139 = scmp.ne.s32.totalorder %s124, %s138
      %p140 = scmp.eq.s32.totalorder %s30, 0
      %p141 = por %p139, %p140
      %s143 = sadd.s32 %s142, 1
      %p146 = scmp.eq.s32.totalorder %s24, 2
      %p147 = scmp.ne.s32.totalorder %s142, %s144
      %p148 = scmp.eq.s32.totalorder %s24, 0
      %p149 = por %p147, %p148
      %p150 = scmp.ne.s32.totalorder %s142, %s144
      %p151 = scmp.eq.s32.totalorder %s29, 2
      %p152 = por %p150, %p151
      %p153 = scmp.ne.s32.totalorder %s144, %s145
      %p154 = scmp.eq.s32.totalorder %s29, 0
      %p155 = por %p153, %p154
      %p156 = scmp.ne.s32.totalorder %s144, %s145
      %p157 = scmp.eq.s32.totalorder %s30, 2
      %p158 = por %p156, %p157
      %p160 = scmp.ne.s32.totalorder %s145, %s159
      %p161 = scmp.eq.s32.totalorder %s30, 0
      %p162 = por %p160, %p161
      %s164 = sadd.s32 %s163, 1
      %p167 = scmp.eq.s32.totalorder %s24, 2
      %p168 = scmp.ne.s32.totalorder %s163, %s165
      %p169 = scmp.eq.s32.totalorder %s24, 0
      %p170 = por %p168, %p169
      %p171 = scmp.ne.s32.totalorder %s163, %s165
      %p172 = scmp.eq.s32.totalorder %s29, 2
      %p173 = por %p171, %p172
      %p174 = scmp.ne.s32.totalorder %s165, %s166
      %p175 = scmp.eq.s32.totalorder %s29, 0
      %p176 = por %p174, %p175
      %p177 = scmp.ne.s32.totalorder %s165, %s166
      %p178 = scmp.eq.s32.totalorder %s30, 2
      %p179 = por %p177, %p178
      %p181 = scmp.ne.s32.totalorder %s166, %s180
      %p182 = scmp.eq.s32.totalorder %s30, 0
      %p183 = por %p181, %p182
      %s184 = ssub.s32 %s24, %s31
      %p185 = scmp.eq.s32.totalorder %s184, 0
      %s187 = sadd.s32 %s186, 1
      %s188 = scalar_select %p185, %s186, %s187
      %p191 = pneg %p185
      %p192 = scmp.eq.s32.totalorder %s24, 2
      %p193 = por %p191, %p192
      %p194 = scmp.ne.s32.totalorder %s186, %s189
      %p195 = scmp.eq.s32.totalorder %s24, 0
      %p196 = por %p194, %p195
      %p197 = scmp.ne.s32.totalorder %s186, %s189
      %p198 = scmp.eq.s32.totalorder %s29, 2
      %p199 = por %p197, %p198
      %p200 = scmp.ne.s32.totalorder %s189, %s190
      %p201 = scmp.eq.s32.totalorder %s29, 0
      %p202 = por %p200, %p201
      %p203 = scmp.ne.s32.totalorder %s189, %s190
      %p204 = scmp.eq.s32.totalorder %s30, 2
      %p205 = por %p203, %p204
      %p207 = scmp.ne.s32.totalorder %s190, %s206
      %p208 = scmp.eq.s32.totalorder %s30, 0
      %p209 = por %p207, %p208
      %p210 = scmp.le.s32.totalorder 1, %s24
      %p211 = scmp.lt.s32.totalorder %s24, 4
      %p212 = pnand %p210, %p211
      %p213 = pneg %p212
      // Predicated region
      $region9: #{tpu_custom_call.1} parent=5 // pred_check
        _
      $region10: #{tpu_custom_call.1} parent=5 // pred_check_branch
        %215 = sbr.rel (%p212) target = $region12
      $region11: #{tpu_custom_call.1} parent=5 // pred_region
        %s216 = ssub.s32 %s24, 1
        // Predicated region
        $region13: #{tpu_custom_call.1} parent=11 // pred_check
          %p217 = pneg %p71
        $region14: #{tpu_custom_call.1} parent=11 // pred_check_branch
          %219 = sbr.rel (%p217) target = $region16
        $region15: #{tpu_custom_call.1} parent=11 // pred_region
          %s221 = ssub.s32 12544, 12544
          %222 = vsyncadd [#allocation7], %s221
          %s223 = sshll.u32 [#allocation6], 4
          %s224 = int_to_ptr.vmem [resolvable:$true] %s223
          %229 = dma.hbm_to_vmem [thread:$0]  %s1, 12544, %s224, [#allocation7], 128, 128, 8
        $region16: #{tpu_custom_call.1} parent=11 // pred_fallthru
          _
        // Predicated region
        $region17: #{tpu_custom_call.1} parent=11 // pred_check
          %p230 = pneg %p92
        $region18: #{tpu_custom_call.1} parent=11 // pred_check_branch
          %232 = sbr.rel (%p230) target = $region20
        $region19: #{tpu_custom_call.1} parent=11 // pred_region
          %s234 = ssub.s32 16, 16
          %235 = vsyncadd [#allocation7], %s234
          %s237 = sshll.u32 [#allocation8], 4
          %s238 = int_to_ptr.vmem [resolvable:$true] %s237
          %240 = dma.hbm_to_vmem [thread:$0]  %s2, 16, %s238, [#allocation7]
        $region20: #{tpu_custom_call.1} parent=11 // pred_fallthru
          _
        // Predicated region
        $region21: #{tpu_custom_call.1} parent=11 // pred_check
          %p241 = pneg %p113
        $region22: #{tpu_custom_call.1} parent=11 // pred_check_branch
          %243 = sbr.rel (%p241) target = $region24
        $region23: #{tpu_custom_call.1} parent=11 // pred_region
          %s245 = ssub.s32 512, 512
          %246 = vsyncadd [#allocation10], %s245
          %s247 = sshll.u32 [#allocation9], 4
          %s248 = int_to_ptr.vmem [resolvable:$true] %s247
          %253 = dma.hbm_to_vmem [thread:$0]  %s3, 512, %s248, [#allocation10], 128, 128, 8
        $region24: #{tpu_custom_call.1} parent=11 // pred_fallthru
          _
        // Predicated region
        $region25: #{tpu_custom_call.1} parent=11 // pred_check
          %p254 = pneg %p134
        $region26: #{tpu_custom_call.1} parent=11 // pred_check_branch
          %256 = sbr.rel (%p254) target = $region28
        $region27: #{tpu_custom_call.1} parent=11 // pred_region
          %s258 = ssub.s32 16, 16
          %259 = vsyncadd [#allocation10], %s258
          %s261 = sshll.u32 [#allocation11], 4
          %s262 = int_to_ptr.vmem [resolvable:$true] %s261
          %264 = dma.hbm_to_vmem [thread:$0]  %s4, 16, %s262, [#allocation10]
        $region28: #{tpu_custom_call.1} parent=11 // pred_fallthru
          _
        // Predicated region
        $region29: #{tpu_custom_call.1} parent=11 // pred_check
          %p265 = pneg %p155
        $region30: #{tpu_custom_call.1} parent=11 // pred_check_branch
          %267 = sbr.rel (%p265) target = $region32
        $region31: #{tpu_custom_call.1} parent=11 // pred_region
          %s269 = ssub.s32 16, 16
          %270 = vsyncadd [#allocation13], %s269
          %s272 = sshll.u32 [#allocation12], 4
          %s273 = int_to_ptr.vmem [resolvable:$true] %s272
          %275 = dma.hbm_to_vmem [thread:$0]  %s5, 16, %s273, [#allocation13]
        $region32: #{tpu_custom_call.1} parent=11 // pred_fallthru
          _
        // Predicated region
        $region33: #{tpu_custom_call.1} parent=11 // pred_check
          %p276 = pneg %p176
        $region34: #{tpu_custom_call.1} parent=11 // pred_check_branch
          %278 = sbr.rel (%p276) target = $region36
        $region35: #{tpu_custom_call.1} parent=11 // pred_region
          _
        $region36: #{tpu_custom_call.1} parent=11 // pred_fallthru
          _
      $region12: #{tpu_custom_call.1} parent=5 // pred_fallthru
        _
      %p279 = scmp.lt.s32.totalorder %s24, 3
      // Predicated region
      $region37: #{tpu_custom_call.1} parent=5 // pred_check
        %p280 = pneg %p279
      $region38: #{tpu_custom_call.1} parent=5 // pred_check_branch
        %282 = sbr.rel (%p280) target = $region40
      $region39: #{tpu_custom_call.1} parent=5 // pred_region
        // Predicated region
        $region41: #{tpu_custom_call.1} parent=39 // pred_check
          %p283 = pneg %p44
        $region42: #{tpu_custom_call.1} parent=39 // pred_check_branch
          %285 = sbr.rel (%p283) target = $region44
        $region43: #{tpu_custom_call.1} parent=39 // pred_region
          %s286 = sand.u32 %s34, 1
          %s287 = scalar_lea.sflag [#allocation4], %s286
          %s288 = sand.u32 %s34, 1
          %s289 = smul.addr %s288, 896
          %s290 = scalar_lea.vmem [#allocation3], %s289
          %s291 = smul.u32 16, %s24
          %s293 = ssub.s32 14336, 14336
          %294 = vsyncadd %s287, %s293
          %s295 = smul.addr %s291, 7
          %s296 = smul.addr %s295, 128
          %s297 = scalar_lea.hbm %s0, %s296
          %s298 = sshll.u32 %s290, 4
          %s299 = int_to_ptr.vmem [resolvable:$true] %s298
          %304 = dma.hbm_to_vmem [thread:$0]  %s297, 14336, %s299, %s287, 896, 896, 56
        $region44: #{tpu_custom_call.1} parent=39 // pred_fallthru
          _
      $region40: #{tpu_custom_call.1} parent=5 // pred_fallthru
        _
      %p305 = scmp.le.s32.totalorder 1, %s24
      %p306 = scmp.lt.s32.totalorder %s24, 4
      %p307 = pnand %p305, %p306
      %p308 = pneg %p307
      // Predicated region
      $region45: #{tpu_custom_call.1} parent=5 // pred_check
        _
      $region46: #{tpu_custom_call.1} parent=5 // pred_check_branch
        %310 = sbr.rel (%p307) target = $region48
      $region47: #{tpu_custom_call.1} parent=5 // pred_region
        %s311 = ssub.s32 %s24, 1
        %s312 = sand.u32 %s37, 1
        %s313 = scalar_lea.sflag [#allocation4], %s312
        %s314 = sand.u32 %s37, 1
        %s315 = smul.addr %s314, 896
        %s316 = scalar_lea.vmem [#allocation3], %s315
        // Predicated region
        $region49: #{tpu_custom_call.1} parent=47 // pred_check
          %p317 = pneg %p50
        $region50: #{tpu_custom_call.1} parent=47 // pred_check_branch
          %319 = sbr.rel (%p317) target = $region52
        $region51: #{tpu_custom_call.1} parent=47 // pred_region
          %320 = dma.done %s313, 14336
        $region52: #{tpu_custom_call.1} parent=47 // pred_fallthru
          _
        // Predicated region
        $region53: #{tpu_custom_call.1} parent=47 // pred_check
          %p321 = pneg %p71
        $region54: #{tpu_custom_call.1} parent=47 // pred_check_branch
          %323 = sbr.rel (%p321) target = $region56
        $region55: #{tpu_custom_call.1} parent=47 // pred_region
          %324 = dma.done [#allocation7], 12544
        $region56: #{tpu_custom_call.1} parent=47 // pred_fallthru
          _
        // Predicated region
        $region57: #{tpu_custom_call.1} parent=47 // pred_check
          %p325 = pneg %p92
        $region58: #{tpu_custom_call.1} parent=47 // pred_check_branch
          %327 = sbr.rel (%p325) target = $region60
        $region59: #{tpu_custom_call.1} parent=47 // pred_region
          %328 = dma.done [#allocation7], 16
        $region60: #{tpu_custom_call.1} parent=47 // pred_fallthru
          _
        // Predicated region
        $region61: #{tpu_custom_call.1} parent=47 // pred_check
          %p329 = pneg %p113
        $region62: #{tpu_custom_call.1} parent=47 // pred_check_branch
          %331 = sbr.rel (%p329) target = $region64
        $region63: #{tpu_custom_call.1} parent=47 // pred_region
          %332 = dma.done [#allocation10], 512
        $region64: #{tpu_custom_call.1} parent=47 // pred_fallthru
          _
        // Predicated region
        $region65: #{tpu_custom_call.1} parent=47 // pred_check
          %p333 = pneg %p134
        $region66: #{tpu_custom_call.1} parent=47 // pred_check_branch
          %335 = sbr.rel (%p333) target = $region68
        $region67: #{tpu_custom_call.1} parent=47 // pred_region
          %336 = dma.done [#allocation10], 16
        $region68: #{tpu_custom_call.1} parent=47 // pred_fallthru
          _
        // Predicated region
        $region69: #{tpu_custom_call.1} parent=47 // pred_check
          %p337 = pneg %p155
        $region70: #{tpu_custom_call.1} parent=47 // pred_check_branch
          %339 = sbr.rel (%p337) target = $region72
        $region71: #{tpu_custom_call.1} parent=47 // pred_region
          %340 = dma.done [#allocation13], 16
        $region72: #{tpu_custom_call.1} parent=47 // pred_fallthru
          _
        %s341 = sand.u32 %s37, 1
        %s342 = scalar_lea.sflag [#allocation4], %s341
        %s343 = sand.u32 %s37, 1
        %s344 = smul.addr %s343, 896
        %s345 = scalar_lea.vmem [#allocation3], %s344
        %p346 = pneg %p50
        %p347 = pneg %p47
        %p348 = pneg %p71
        %p349 = pneg %p68
        %p350 = pneg %p92
        %p351 = pneg %p89
        %p352 = pneg %p113
        %p353 = pneg %p110
        %p354 = pneg %p134
        %p355 = pneg %p131
        %p356 = pneg %p155
        %p357 = pneg %p152
        %p358 = pneg %p176
        %p359 = pneg %p173
        %p360 = pneg %p202
        %p361 = pneg %p199
        %s362 = sand.u32 %s189, 1
        %s363 = scalar_lea.sflag [#allocation5], %s362
        %s364 = sand.u32 %s189, 1
        %s365 = smul.addr %s364, 128
        %s366 = scalar_lea.vmem [#allocation14], %s365
        %s367 = smul.u32 16, %s29
        %s368 = smul.u32 16, %s29
        %v369 = vld [vmem:[%s316] sm:$0xff]
        %v370 = vld [vmem:[%s316 + $0x8] sm:$0xff]
        %v371 = vld [vmem:[%s316 + $0x10] sm:$0xff]
        %v372 = vld [vmem:[%s316 + $0x18] sm:$0xff]
        %v373 = vld [vmem:[%s316 + $0x20] sm:$0xff]
        %v374 = vld [vmem:[%s316 + $0x28] sm:$0xff]
        %v375 = vld [vmem:[%s316 + $0x30] sm:$0xff]
        %v376 = vld [vmem:[%s316 + $0x38] sm:$0xff]
        %v377 = vld [vmem:[%s316 + $0x40] sm:$0xff]
        %v378 = vld [vmem:[%s316 + $0x48] sm:$0xff]
        %v379 = vld [vmem:[%s316 + $0x50] sm:$0xff]
        %v380 = vld [vmem:[%s316 + $0x58] sm:$0xff]
        %v381 = vld [vmem:[%s316 + $0x60] sm:$0xff]
        %v382 = vld [vmem:[%s316 + $0x68] sm:$0xff]
        %v383 = vld [vmem:[%s316 + $0x70] sm:$0xff]
        %v384 = vld [vmem:[%s316 + $0x78] sm:$0xff]
        %v385 = vld [vmem:[%s316 + $0x80] sm:$0xff]
        %v386 = vld [vmem:[%s316 + $0x88] sm:$0xff]
        %v387 = vld [vmem:[%s316 + $0x90] sm:$0xff]
        %v388 = vld [vmem:[%s316 + $0x98] sm:$0xff]
        %v389 = vld [vmem:[%s316 + $0xa0] sm:$0xff]
        %v390 = vld [vmem:[%s316 + $0xa8] sm:$0xff]
        %v391 = vld [vmem:[%s316 + $0xb0] sm:$0xff]
        %v392 = vld [vmem:[%s316 + $0xb8] sm:$0xff]
        %v393 = vld [vmem:[%s316 + $0xc0] sm:$0xff]
        %v394 = vld [vmem:[%s316 + $0xc8] sm:$0xff]
        %v395 = vld [vmem:[%s316 + $0xd0] sm:$0xff]
        %v396 = vld [vmem:[%s316 + $0xd8] sm:$0xff]
        %v397 = vld [vmem:[%s316 + $0xe0] sm:$0xff]
        %v398 = vld [vmem:[%s316 + $0xe8] sm:$0xff]
        %v399 = vld [vmem:[%s316 + $0xf0] sm:$0xff]
        %v400 = vld [vmem:[%s316 + $0xf8] sm:$0xff]
        %v401 = vld [vmem:[%s316 + $0x100] sm:$0xff]
        %v402 = vld [vmem:[%s316 + $0x108] sm:$0xff]
        %v403 = vld [vmem:[%s316 + $0x110] sm:$0xff]
        %v404 = vld [vmem:[%s316 + $0x118] sm:$0xff]
        %v405 = vld [vmem:[%s316 + $0x120] sm:$0xff]
        %v406 = vld [vmem:[%s316 + $0x128] sm:$0xff]
        %v407 = vld [vmem:[%s316 + $0x130] sm:$0xff]
        %v408 = vld [vmem:[%s316 + $0x138] sm:$0xff]
        %v409 = vld [vmem:[%s316 + $0x140] sm:$0xff]
        %v410 = vld [vmem:[%s316 + $0x148] sm:$0xff]
        %v411 = vld [vmem:[%s316 + $0x150] sm:$0xff]
        %v412 = vld [vmem:[%s316 + $0x158] sm:$0xff]
        %v413 = vld [vmem:[%s316 + $0x160] sm:$0xff]
        %v414 = vld [vmem:[%s316 + $0x168] sm:$0xff]
        %v415 = vld [vmem:[%s316 + $0x170] sm:$0xff]
        %v416 = vld [vmem:[%s316 + $0x178] sm:$0xff]
        %v417 = vld [vmem:[%s316 + $0x180] sm:$0xff]
        %v418 = vld [vmem:[%s316 + $0x188] sm:$0xff]
        %v419 = vld [vmem:[%s316 + $0x190] sm:$0xff]
        %v420 = vld [vmem:[%s316 + $0x198] sm:$0xff]
        %v421 = vld [vmem:[%s316 + $0x1a0] sm:$0xff]
        %v422 = vld [vmem:[%s316 + $0x1a8] sm:$0xff]
        %v423 = vld [vmem:[%s316 + $0x1b0] sm:$0xff]
        %v424 = vld [vmem:[%s316 + $0x1b8] sm:$0xff]
        %v425 = vld [vmem:[%s316 + $0x1c0] sm:$0xff]
        %v426 = vld [vmem:[%s316 + $0x1c8] sm:$0xff]
        %v427 = vld [vmem:[%s316 + $0x1d0] sm:$0xff]
        %v428 = vld [vmem:[%s316 + $0x1d8] sm:$0xff]
        %v429 = vld [vmem:[%s316 + $0x1e0] sm:$0xff]
        %v430 = vld [vmem:[%s316 + $0x1e8] sm:$0xff]
        %v431 = vld [vmem:[%s316 + $0x1f0] sm:$0xff]
        %v432 = vld [vmem:[%s316 + $0x1f8] sm:$0xff]
        %v433 = vld [vmem:[%s316 + $0x200] sm:$0xff]
        %v434 = vld [vmem:[%s316 + $0x208] sm:$0xff]
        %v435 = vld [vmem:[%s316 + $0x210] sm:$0xff]
        %v436 = vld [vmem:[%s316 + $0x218] sm:$0xff]
        %v437 = vld [vmem:[%s316 + $0x220] sm:$0xff]
        %v438 = vld [vmem:[%s316 + $0x228] sm:$0xff]
        %v439 = vld [vmem:[%s316 + $0x230] sm:$0xff]
        %v440 = vld [vmem:[%s316 + $0x238] sm:$0xff]
        %v441 = vld [vmem:[%s316 + $0x240] sm:$0xff]
        %v442 = vld [vmem:[%s316 + $0x248] sm:$0xff]
        %v443 = vld [vmem:[%s316 + $0x250] sm:$0xff]
        %v444 = vld [vmem:[%s316 + $0x258] sm:$0xff]
        %v445 = vld [vmem:[%s316 + $0x260] sm:$0xff]
        %v446 = vld [vmem:[%s316 + $0x268] sm:$0xff]
        %v447 = vld [vmem:[%s316 + $0x270] sm:$0xff]
        %v448 = vld [vmem:[%s316 + $0x278] sm:$0xff]
        %v449 = vld [vmem:[%s316 + $0x280] sm:$0xff]
        %v450 = vld [vmem:[%s316 + $0x288] sm:$0xff]
        %v451 = vld [vmem:[%s316 + $0x290] sm:$0xff]
        %v452 = vld [vmem:[%s316 + $0x298] sm:$0xff]
        %v453 = vld [vmem:[%s316 + $0x2a0] sm:$0xff]
        %v454 = vld [vmem:[%s316 + $0x2a8] sm:$0xff]
        %v455 = vld [vmem:[%s316 + $0x2b0] sm:$0xff]
        %v456 = vld [vmem:[%s316 + $0x2b8] sm:$0xff]
        %v457 = vld [vmem:[%s316 + $0x2c0] sm:$0xff]
        %v458 = vld [vmem:[%s316 + $0x2c8] sm:$0xff]
        %v459 = vld [vmem:[%s316 + $0x2d0] sm:$0xff]
        %v460 = vld [vmem:[%s316 + $0x2d8] sm:$0xff]
        %v461 = vld [vmem:[%s316 + $0x2e0] sm:$0xff]
        %v462 = vld [vmem:[%s316 + $0x2e8] sm:$0xff]
        %v463 = vld [vmem:[%s316 + $0x2f0] sm:$0xff]
        %v464 = vld [vmem:[%s316 + $0x2f8] sm:$0xff]
        %v465 = vld [vmem:[%s316 + $0x300] sm:$0xff]
        %v466 = vld [vmem:[%s316 + $0x308] sm:$0xff]
        %v467 = vld [vmem:[%s316 + $0x310] sm:$0xff]
        %v468 = vld [vmem:[%s316 + $0x318] sm:$0xff]
        %v469 = vld [vmem:[%s316 + $0x320] sm:$0xff]
        %v470 = vld [vmem:[%s316 + $0x328] sm:$0xff]
        %v471 = vld [vmem:[%s316 + $0x330] sm:$0xff]
        %v472 = vld [vmem:[%s316 + $0x338] sm:$0xff]
        %v473 = vld [vmem:[%s316 + $0x340] sm:$0xff]
        %v474 = vld [vmem:[%s316 + $0x348] sm:$0xff]
        %v475 = vld [vmem:[%s316 + $0x350] sm:$0xff]
        %v476 = vld [vmem:[%s316 + $0x358] sm:$0xff]
        %v477 = vld [vmem:[%s316 + $0x360] sm:$0xff]
        %v478 = vld [vmem:[%s316 + $0x368] sm:$0xff]
        %v479 = vld [vmem:[%s316 + $0x370] sm:$0xff]
        %v480 = vld [vmem:[%s316 + $0x378] sm:$0xff]
        %v481 = vld [vmem:[#allocation6] sm:$0xff]
        %v482 = vld [vmem:[#allocation6 + $0x8] sm:$0xff]
        %v483 = vld [vmem:[#allocation6 + $0x10] sm:$0xff]
        %v484 = vld [vmem:[#allocation6 + $0x18] sm:$0xff]
        %v485 = vld [vmem:[#allocation6 + $0x20] sm:$0xff]
        %v486 = vld [vmem:[#allocation6 + $0x28] sm:$0xff]
        %v487 = vld [vmem:[#allocation6 + $0x30] sm:$0xff]
        %v488 = vld [vmem:[#allocation6 + $0x38] sm:$0xff]
        %v489 = vld [vmem:[#allocation6 + $0x40] sm:$0xff]
        %v490 = vld [vmem:[#allocation6 + $0x48] sm:$0xff]
        %v491 = vld [vmem:[#allocation6 + $0x50] sm:$0xff]
        %v492 = vld [vmem:[#allocation6 + $0x58] sm:$0xff]
        %v493 = vld [vmem:[#allocation6 + $0x60] sm:$0xff]
        %v494 = vld [vmem:[#allocation6 + $0x68] sm:$0xff]
        %v495 = vld [vmem:[#allocation6 + $0x70] sm:$0xff]
        %v496 = vld [vmem:[#allocation6 + $0x78] sm:$0xff]
        %v497 = vld [vmem:[#allocation6 + $0x80] sm:$0xff]
        %v498 = vld [vmem:[#allocation6 + $0x88] sm:$0xff]
        %v499 = vld [vmem:[#allocation6 + $0x90] sm:$0xff]
        %v500 = vld [vmem:[#allocation6 + $0x98] sm:$0xff]
        %v501 = vld [vmem:[#allocation6 + $0xa0] sm:$0xff]
        %v502 = vld [vmem:[#allocation6 + $0xa8] sm:$0xff]
        %v503 = vld [vmem:[#allocation6 + $0xb0] sm:$0xff]
        %v504 = vld [vmem:[#allocation6 + $0xb8] sm:$0xff]
        %v505 = vld [vmem:[#allocation6 + $0xc0] sm:$0xff]
        %v506 = vld [vmem:[#allocation6 + $0xc8] sm:$0xff]
        %v507 = vld [vmem:[#allocation6 + $0xd0] sm:$0xff]
        %v508 = vld [vmem:[#allocation6 + $0xd8] sm:$0xff]
        %v509 = vld [vmem:[#allocation6 + $0xe0] sm:$0xff]
        %v510 = vld [vmem:[#allocation6 + $0xe8] sm:$0xff]
        %v511 = vld [vmem:[#allocation6 + $0xf0] sm:$0xff]
        %v512 = vld [vmem:[#allocation6 + $0xf8] sm:$0xff]
        %v513 = vld [vmem:[#allocation6 + $0x100] sm:$0xff]
        %v514 = vld [vmem:[#allocation6 + $0x108] sm:$0xff]
        %v515 = vld [vmem:[#allocation6 + $0x110] sm:$0xff]
        %v516 = vld [vmem:[#allocation6 + $0x118] sm:$0xff]
        %v517 = vld [vmem:[#allocation6 + $0x120] sm:$0xff]
        %v518 = vld [vmem:[#allocation6 + $0x128] sm:$0xff]
        %v519 = vld [vmem:[#allocation6 + $0x130] sm:$0xff]
        %v520 = vld [vmem:[#allocation6 + $0x138] sm:$0xff]
        %v521 = vld [vmem:[#allocation6 + $0x140] sm:$0xff]
        %v522 = vld [vmem:[#allocation6 + $0x148] sm:$0xff]
        %v523 = vld [vmem:[#allocation6 + $0x150] sm:$0xff]
        %v524 = vld [vmem:[#allocation6 + $0x158] sm:$0xff]
        %v525 = vld [vmem:[#allocation6 + $0x160] sm:$0xff]
        %v526 = vld [vmem:[#allocation6 + $0x168] sm:$0xff]
        %v527 = vld [vmem:[#allocation6 + $0x170] sm:$0xff]
        %v528 = vld [vmem:[#allocation6 + $0x178] sm:$0xff]
        %v529 = vld [vmem:[#allocation6 + $0x180] sm:$0xff]
        %v530 = vld [vmem:[#allocation6 + $0x188] sm:$0xff]
        %v531 = vld [vmem:[#allocation6 + $0x190] sm:$0xff]
        %v532 = vld [vmem:[#allocation6 + $0x198] sm:$0xff]
        %v533 = vld [vmem:[#allocation6 + $0x1a0] sm:$0xff]
        %v534 = vld [vmem:[#allocation6 + $0x1a8] sm:$0xff]
        %v535 = vld [vmem:[#allocation6 + $0x1b0] sm:$0xff]
        %v536 = vld [vmem:[#allocation6 + $0x1b8] sm:$0xff]
        %v537 = vld [vmem:[#allocation6 + $0x1c0] sm:$0xff]
        %v538 = vld [vmem:[#allocation6 + $0x1c8] sm:$0xff]
        %v539 = vld [vmem:[#allocation6 + $0x1d0] sm:$0xff]
        %v540 = vld [vmem:[#allocation6 + $0x1d8] sm:$0xff]
        %v541 = vld [vmem:[#allocation6 + $0x1e0] sm:$0xff]
        %v542 = vld [vmem:[#allocation6 + $0x1e8] sm:$0xff]
        %v543 = vld [vmem:[#allocation6 + $0x1f0] sm:$0xff]
        %v544 = vld [vmem:[#allocation6 + $0x1f8] sm:$0xff]
        %v545 = vld [vmem:[#allocation6 + $0x200] sm:$0xff]
        %v546 = vld [vmem:[#allocation6 + $0x208] sm:$0xff]
        %v547 = vld [vmem:[#allocation6 + $0x210] sm:$0xff]
        %v548 = vld [vmem:[#allocation6 + $0x218] sm:$0xff]
        %v549 = vld [vmem:[#allocation6 + $0x220] sm:$0xff]
        %v550 = vld [vmem:[#allocation6 + $0x228] sm:$0xff]
        %v551 = vld [vmem:[#allocation6 + $0x230] sm:$0xff]
        %v552 = vld [vmem:[#allocation6 + $0x238] sm:$0xff]
        %v553 = vld [vmem:[#allocation6 + $0x240] sm:$0xff]
        %v554 = vld [vmem:[#allocation6 + $0x248] sm:$0xff]
        %v555 = vld [vmem:[#allocation6 + $0x250] sm:$0xff]
        %v556 = vld [vmem:[#allocation6 + $0x258] sm:$0xff]
        %v557 = vld [vmem:[#allocation6 + $0x260] sm:$0xff]
        %v558 = vld [vmem:[#allocation6 + $0x268] sm:$0xff]
        %v559 = vld [vmem:[#allocation6 + $0x270] sm:$0xff]
        %v560 = vld [vmem:[#allocation6 + $0x278] sm:$0xff]
        %v561 = vld [vmem:[#allocation6 + $0x280] sm:$0xff]
        %v562 = vld [vmem:[#allocation6 + $0x288] sm:$0xff]
        %v563 = vld [vmem:[#allocation6 + $0x290] sm:$0xff]
        %v564 = vld [vmem:[#allocation6 + $0x298] sm:$0xff]
        %v565 = vld [vmem:[#allocation6 + $0x2a0] sm:$0xff]
        %v566 = vld [vmem:[#allocation6 + $0x2a8] sm:$0xff]
        %v567 = vld [vmem:[#allocation6 + $0x2b0] sm:$0xff]
        %v568 = vld [vmem:[#allocation6 + $0x2b8] sm:$0xff]
        %v569 = vld [vmem:[#allocation6 + $0x2c0] sm:$0xff]
        %v570 = vld [vmem:[#allocation6 + $0x2c8] sm:$0xff]
        %v571 = vld [vmem:[#allocation6 + $0x2d0] sm:$0xff]
        %v572 = vld [vmem:[#allocation6 + $0x2d8] sm:$0xff]
        %v573 = vld [vmem:[#allocation6 + $0x2e0] sm:$0xff]
        %v574 = vld [vmem:[#allocation6 + $0x2e8] sm:$0xff]
        %v575 = vld [vmem:[#allocation6 + $0x2f0] sm:$0xff]
        %v576 = vld [vmem:[#allocation6 + $0x2f8] sm:$0xff]
        %v577 = vld [vmem:[#allocation6 + $0x300] sm:$0xff]
        %v578 = vld [vmem:[#allocation6 + $0x308] sm:$0xff]
        %v579 = vld [vmem:[#allocation8] sm:$0x1]
        %v581 = vlaneseq
        %v582 = vshrl.u32 %v581, 7
        %v583 = vsub.s32 0, %v582
        %v584 = vrot.slane %v579, %v583
        %vm586 = vcmask 130048
        %v588 = vsel %vm586, %v375, 0
        %v591 = vsel %vm586, %v382, 0
        %v594 = vsel %vm586, %v389, 0
        %v597 = vsel %vm586, %v396, 0
        %v600 = vsel %vm586, %v403, 0
        %v603 = vsel %vm586, %v410, 0
        %v606 = vsel %vm586, %v417, 0
        %v609 = vsel %vm586, %v424, 0
        %v612 = vsel %vm586, %v431, 0
        %v615 = vsel %vm586, %v438, 0
        %v618 = vsel %vm586, %v445, 0
        %v621 = vsel %vm586, %v452, 0
        %v624 = vsel %vm586, %v459, 0
        %v627 = vsel %vm586, %v466, 0
        %v630 = vsel %vm586, %v473, 0
        %v633 = vsel %vm586, %v480, 0
        %635 = vmatprep.subr.mxu0 0.0
        %636 = vmatpush1.msra.mxu0 %v481
        %637 = vmatprep.subr.mxu0 0.0
        %638 = vmatpush1.msra.mxu0 %v482
        %639 = vmatprep.subr.mxu0 0.0
        %640 = vmatpush1.msra.mxu0 %v483
        %641 = vmatprep.subr.mxu0 0.0
        %642 = vmatpush1.msra.mxu0 %v484
        %643 = vmatprep.subr.mxu0 0.0
        %644 = vmatpush1.msra.mxu0 %v485
        %645 = vmatprep.subr.mxu0 0.0
        %646 = vmatpush1.msra.mxu0 %v486
        %647 = vmatprep.subr.mxu0 0.0
        %648 = vmatpush1.msra.mxu0 %v487
        %649 = vmatprep.subr.mxu0 0.0
        %650 = vmatpush1.msra.mxu0 %v488
        %651 = vmatprep.subr.mxu0 0.0
        %652 = vmatpush1.msra.mxu0 %v489
        %653 = vmatprep.subr.mxu0 0.0
        %654 = vmatpush1.msra.mxu0 %v490
        %655 = vmatprep.subr.mxu0 0.0
        %656 = vmatpush1.msra.mxu0 %v491
        %657 = vmatprep.subr.mxu0 0.0
        %658 = vmatpush1.msra.mxu0 %v492
        %659 = vmatprep.subr.mxu0 0.0
        %660 = vmatpush1.msra.mxu0 %v493
        %661 = vmatprep.subr.mxu0 0.0
        %662 = vmatpush1.msra.mxu0 %v494
        %663 = vmatprep.subr.mxu0 0.0
        %664 = vmatpush1.msra.mxu0 %v495
        %665 = vmatprep.subr.mxu0 0.0
        %666 = vmatpush1.msra.mxu0 %v496
        %667 = vmatprep.subr.mxu0 0.0
        %668 = vmatpush1.msra.mxu0 %v497
        %669 = vmatprep.subr.mxu0 0.0
        %670 = vmatpush1.msra.mxu0 %v498
        %671 = vmatprep.subr.mxu0 0.0
        %672 = vmatpush1.msra.mxu0 %v499
        %673 = vmatprep.subr.mxu0 0.0
        %674 = vmatpush1.msra.mxu0 %v500
        %675 = vmatprep.subr.mxu0 0.0
        %676 = vmatpush1.msra.mxu0 %v501
        %677 = vmatprep.subr.mxu0 0.0
        %678 = vmatpush1.msra.mxu0 %v502
        %679 = vmatprep.subr.mxu0 0.0
        %680 = vmatpush1.msra.mxu0 %v503
        %681 = vmatprep.subr.mxu0 0.0
        %682 = vmatpush1.msra.mxu0 %v504
        %683 = vmatprep.subr.mxu0 0.0
        %684 = vmatpush1.msra.mxu0 %v505
        %685 = vmatprep.subr.mxu0 0.0
        %686 = vmatpush1.msra.mxu0 %v506
        %687 = vmatprep.subr.mxu0 0.0
        %688 = vmatpush1.msra.mxu0 %v507
        %689 = vmatprep.subr.mxu0 0.0
        %690 = vmatpush1.msra.mxu0 %v508
        %691 = vmatprep.subr.mxu0 0.0
        %692 = vmatpush1.msra.mxu0 %v509
        %693 = vmatprep.subr.mxu0 0.0
        %694 = vmatpush1.msra.mxu0 %v510
        %695 = vmatprep.subr.mxu0 0.0
        %696 = vmatpush1.msra.mxu0 %v511
        %697 = vmatprep.subr.mxu0 0.0
        %698 = vmatpush1.msra.mxu0 %v512
        %699 = vmatprep.mubr.f32.mxu0 %v370
        %700 = vmatmul.mubr.f32.gmra.mrb[0].mxu0 %v369
        %v701 = vpop.f32.mrb[0].mxu0
        %v702 = vadd.f32 %v584, %v701
        %v703 = vpop.f32.mrb[0].mxu0
        %704 = vmatprep.mubr.f32.mxu0 %v377
        %705 = vmatmul.mubr.f32.gmra.mrb[0].mxu0 %v376
        %v706 = vpop.f32.mrb[0].mxu0
        %v707 = vadd.f32 %v584, %v706
        %v708 = vpop.f32.mrb[0].mxu0
        %709 = vmatprep.mubr.f32.mxu0 %v384
        %710 = vmatmul.mubr.f32.gmra.mrb[0].mxu0 %v383
        %v711 = vpop.f32.mrb[0].mxu0
        %v712 = vadd.f32 %v584, %v711
        %v713 = vpop.f32.mrb[0].mxu0
        %714 = vmatprep.mubr.f32.mxu0 %v391
        %715 = vmatmul.mubr.f32.gmra.mrb[0].mxu0 %v390
        %v716 = vpop.f32.mrb[0].mxu0
        %v717 = vadd.f32 %v584, %v716
        %v718 = vpop.f32.mrb[0].mxu0
        %719 = vmatprep.mubr.f32.mxu0 %v398
        %720 = vmatmul.mubr.f32.gmra.mrb[0].mxu0 %v397
        %v721 = vpop.f32.mrb[0].mxu0
        %v722 = vadd.f32 %v584, %v721
        %v723 = vpop.f32.mrb[0].mxu0
        %724 = vmatprep.mubr.f32.mxu0 %v405
        %725 = vmatmul.mubr.f32.gmra.mrb[0].mxu0 %v404
        %v726 = vpop.f32.mrb[0].mxu0
        %v727 = vadd.f32 %v584, %v726
        %v728 = vpop.f32.mrb[0].mxu0
        %729 = vmatprep.mubr.f32.mxu0 %v412
        %730 = vmatmul.mubr.f32.gmra.mrb[0].mxu0 %v411
        %v731 = vpop.f32.mrb[0].mxu0
        %v732 = vadd.f32 %v584, %v731
        %v733 = vpop.f32.mrb[0].mxu0
        %734 = vmatprep.mubr.f32.mxu0 %v419
        %735 = vmatmul.mubr.f32.gmra.mrb[0].mxu0 %v418
        %v736 = vpop.f32.mrb[0].mxu0
        %v737 = vadd.f32 %v584, %v736
        %v738 = vpop.f32.mrb[0].mxu0
        %739 = vmatprep.mubr.f32.mxu0 %v426
        %740 = vmatmul.mubr.f32.gmra.mrb[0].mxu0 %v425
        %v741 = vpop.f32.mrb[0].mxu0
        %v742 = vadd.f32 %v584, %v741
        %v743 = vpop.f32.mrb[0].mxu0
        %744 = vmatprep.mubr.f32.mxu0 %v433
        %745 = vmatmul.mubr.f32.gmra.mrb[0].mxu0 %v432
        %v746 = vpop.f32.mrb[0].mxu0
        %v747 = vadd.f32 %v584, %v746
        %v748 = vpop.f32.mrb[0].mxu0
        %749 = vmatprep.mubr.f32.mxu0 %v440
        %750 = vmatmul.mubr.f32.gmra.mrb[0].mxu0 %v439
        %v751 = vpop.f32.mrb[0].mxu0
        %v752 = vadd.f32 %v584, %v751
        %v753 = vpop.f32.mrb[0].mxu0
        %754 = vmatprep.mubr.f32.mxu0 %v447
        %755 = vmatmul.mubr.f32.gmra.mrb[0].mxu0 %v446
        %v756 = vpop.f32.mrb[0].mxu0
        %v757 = vadd.f32 %v584, %v756
        %v758 = vpop.f32.mrb[0].mxu0
        %759 = vmatprep.mubr.f32.mxu0 %v454
        %760 = vmatmul.mubr.f32.gmra.mrb[0].mxu0 %v453
        %v761 = vpop.f32.mrb[0].mxu0
        %v762 = vadd.f32 %v584, %v761
        %v763 = vpop.f32.mrb[0].mxu0
        %764 = vmatprep.mubr.f32.mxu0 %v461
        %765 = vmatmul.mubr.f32.gmra.mrb[0].mxu0 %v460
        %v766 = vpop.f32.mrb[0].mxu0
        %v767 = vadd.f32 %v584, %v766
        %v768 = vpop.f32.mrb[0].mxu0
        %769 = vmatprep.mubr.f32.mxu0 %v468
        %770 = vmatmul.mubr.f32.gmra.mrb[0].mxu0 %v467
        %v771 = vpop.f32.mrb[0].mxu0
        %v772 = vadd.f32 %v584, %v771
        %v773 = vpop.f32.mrb[0].mxu0
        %774 = vmatprep.mubr.f32.mxu0 %v475
        %775 = vmatmul.mubr.f32.gmra.mrb[0].mxu0 %v474
        %v776 = vpop.f32.mrb[0].mxu0
        %v777 = vadd.f32 %v584, %v776
        %v778 = vpop.f32.mrb[0].mxu0
        %779 = vdwg.mxu0
        %780 = vmatprep.subr.mxu0 0.0
        %781 = vmatpush1.msra.mxu0 %v513
        %782 = vmatprep.subr.mxu0 0.0
        %783 = vmatpush1.msra.mxu0 %v514
        %784 = vmatprep.subr.mxu0 0.0
        %785 = vmatpush1.msra.mxu0 %v515
        %786 = vmatprep.subr.mxu0 0.0
        %787 = vmatpush1.msra.mxu0 %v516
        %788 = vmatprep.subr.mxu0 0.0
        %789 = vmatpush1.msra.mxu0 %v517
        %790 = vmatprep.subr.mxu0 0.0
        %791 = vmatpush1.msra.mxu0 %v518
        %792 = vmatprep.subr.mxu0 0.0
        %793 = vmatpush1.msra.mxu0 %v519
        %794 = vmatprep.subr.mxu0 0.0
        %795 = vmatpush1.msra.mxu0 %v520
        %796 = vmatprep.subr.mxu0 0.0
        %797 = vmatpush1.msra.mxu0 %v521
        %798 = vmatprep.subr.mxu0 0.0
        %799 = vmatpush1.msra.mxu0 %v522
        %800 = vmatprep.subr.mxu0 0.0
        %801 = vmatpush1.msra.mxu0 %v523
        %802 = vmatprep.subr.mxu0 0.0
        %803 = vmatpush1.msra.mxu0 %v524
        %804 = vmatprep.subr.mxu0 0.0
        %805 = vmatpush1.msra.mxu0 %v525
        %806 = vmatprep.subr.mxu0 0.0
        %807 = vmatpush1.msra.mxu0 %v526
        %808 = vmatprep.subr.mxu0 0.0
        %809 = vmatpush1.msra.mxu0 %v527
        %810 = vmatprep.subr.mxu0 0.0
        %811 = vmatpush1.msra.mxu0 %v528
        %812 = vmatprep.subr.mxu0 0.0
        %813 = vmatpush1.msra.mxu0 %v529
        %814 = vmatprep.subr.mxu0 0.0
        %815 = vmatpush1.msra.mxu0 %v530
        %816 = vmatprep.subr.mxu0 0.0
        %817 = vmatpush1.msra.mxu0 %v531
        %818 = vmatprep.subr.mxu0 0.0
        %819 = vmatpush1.msra.mxu0 %v532
        %820 = vmatprep.subr.mxu0 0.0
        %821 = vmatpush1.msra.mxu0 %v533
        %822 = vmatprep.subr.mxu0 0.0
        %823 = vmatpush1.msra.mxu0 %v534
        %824 = vmatprep.subr.mxu0 0.0
        %825 = vmatpush1.msra.mxu0 %v535
        %826 = vmatprep.subr.mxu0 0.0
        %827 = vmatpush1.msra.mxu0 %v536
        %828 = vmatprep.subr.mxu0 0.0
        %829 = vmatpush1.msra.mxu0 %v537
        %830 = vmatprep.subr.mxu0 0.0
        %831 = vmatpush1.msra.mxu0 %v538
        %832 = vmatprep.subr.mxu0 0.0
        %833 = vmatpush1.msra.mxu0 %v539
        %834 = vmatprep.subr.mxu0 0.0
        %835 = vmatpush1.msra.mxu0 %v540
        %836 = vmatprep.subr.mxu0 0.0
        %837 = vmatpush1.msra.mxu0 %v541
        %838 = vmatprep.subr.mxu0 0.0
        %839 = vmatpush1.msra.mxu0 %v542
        %840 = vmatprep.subr.mxu0 0.0
        %841 = vmatpush1.msra.mxu0 %v543
        %842 = vmatprep.subr.mxu0 0.0
        %843 = vmatpush1.msra.mxu0 %v544
        %844 = vmatprep.mubr.f32.mxu0 %v372
        %845 = vmatmul.mubr.f32.gmra.mrb[0].mxu0 %v371
        %v846 = vpop.f32.mrb[0].mxu0
        %v847 = vadd.f32 %v702, %v846
        %v848 = vpop.f32.mrb[0].mxu0
        %849 = vmatprep.mubr.f32.mxu0 %v379
        %850 = vmatmul.mubr.f32.gmra.mrb[0].mxu0 %v378
        %v851 = vpop.f32.mrb[0].mxu0
        %v852 = vadd.f32 %v707, %v851
        %v853 = vpop.f32.mrb[0].mxu0
        %854 = vmatprep.mubr.f32.mxu0 %v386
        %855 = vmatmul.mubr.f32.gmra.mrb[0].mxu0 %v385
        %v856 = vpop.f32.mrb[0].mxu0
        %v857 = vadd.f32 %v712, %v856
        %v858 = vpop.f32.mrb[0].mxu0
        %859 = vmatprep.mubr.f32.mxu0 %v393
        %860 = vmatmul.mubr.f32.gmra.mrb[0].mxu0 %v392
        %v861 = vpop.f32.mrb[0].mxu0
        %v862 = vadd.f32 %v717, %v861
        %v863 = vpop.f32.mrb[0].mxu0
        %864 = vmatprep.mubr.f32.mxu0 %v400
        %865 = vmatmul.mubr.f32.gmra.mrb[0].mxu0 %v399
        %v866 = vpop.f32.mrb[0].mxu0
        %v867 = vadd.f32 %v722, %v866
        %v868 = vpop.f32.mrb[0].mxu0
        %869 = vmatprep.mubr.f32.mxu0 %v407
        %870 = vmatmul.mubr.f32.gmra.mrb[0].mxu0 %v406
        %v871 = vpop.f32.mrb[0].mxu0
        %v872 = vadd.f32 %v727, %v871
        %v873 = vpop.f32.mrb[0].mxu0
        %874 = vmatprep.mubr.f32.mxu0 %v414
        %875 = vmatmul.mubr.f32.gmra.mrb[0].mxu0 %v413
        %v876 = vpop.f32.mrb[0].mxu0
        %v877 = vadd.f32 %v732, %v876
        %v878 = vpop.f32.mrb[0].mxu0
        %879 = vmatprep.mubr.f32.mxu0 %v421
        %880 = vmatmul.mubr.f32.gmra.mrb[0].mxu0 %v420
        %v881 = vpop.f32.mrb[0].mxu0
        %v882 = vadd.f32 %v737, %v881
        %v883 = vpop.f32.mrb[0].mxu0
        %884 = vmatprep.mubr.f32.mxu0 %v428
        %885 = vmatmul.mubr.f32.gmra.mrb[0].mxu0 %v427
        %v886 = vpop.f32.mrb[0].mxu0
        %v887 = vadd.f32 %v742, %v886
        %v888 = vpop.f32.mrb[0].mxu0
        %889 = vmatprep.mubr.f32.mxu0 %v435
        %890 = vmatmul.mubr.f32.gmra.mrb[0].mxu0 %v434
        %v891 = vpop.f32.mrb[0].mxu0
        %v892 = vadd.f32 %v747, %v891
        %v893 = vpop.f32.mrb[0].mxu0
        %894 = vmatprep.mubr.f32.mxu0 %v442
        %895 = vmatmul.mubr.f32.gmra.mrb[0].mxu0 %v441
        %v896 = vpop.f32.mrb[0].mxu0
        %v897 = vadd.f32 %v752, %v896
        %v898 = vpop.f32.mrb[0].mxu0
        %899 = vmatprep.mubr.f32.mxu0 %v449
        %900 = vmatmul.mubr.f32.gmra.mrb[0].mxu0 %v448
        %v901 = vpop.f32.mrb[0].mxu0
        %v902 = vadd.f32 %v757, %v901
        %v903 = vpop.f32.mrb[0].mxu0
        %904 = vmatprep.mubr.f32.mxu0 %v456
        %905 = vmatmul.mubr.f32.gmra.mrb[0].mxu0 %v455
        %v906 = vpop.f32.mrb[0].mxu0
        %v907 = vadd.f32 %v762, %v906
        %v908 = vpop.f32.mrb[0].mxu0
        %909 = vmatprep.mubr.f32.mxu0 %v463
        %910 = vmatmul.mubr.f32.gmra.mrb[0].mxu0 %v462
        %v911 = vpop.f32.mrb[0].mxu0
        %v912 = vadd.f32 %v767, %v911
        %v913 = vpop.f32.mrb[0].mxu0
        %914 = vmatprep.mubr.f32.mxu0 %v470
        %915 = vmatmul.mubr.f32.gmra.mrb[0].mxu0 %v469
        %v916 = vpop.f32.mrb[0].mxu0
        %v917 = vadd.f32 %v772, %v916
        %v918 = vpop.f32.mrb[0].mxu0
        %919 = vmatprep.mubr.f32.mxu0 %v477
        %920 = vmatmul.mubr.f32.gmra.mrb[0].mxu0 %v476
        %v921 = vpop.f32.mrb[0].mxu0
        %v922 = vadd.f32 %v777, %v921
        %v923 = vpop.f32.mrb[0].mxu0
        %924 = vdwg.mxu0
        %925 = vmatprep.subr.mxu0 0.0
        %926 = vmatpush1.msra.mxu0 %v545
        %927 = vmatprep.subr.mxu0 0.0
        %928 = vmatpush1.msra.mxu0 %v546
        %929 = vmatprep.subr.mxu0 0.0
        %930 = vmatpush1.msra.mxu0 %v547
        %931 = vmatprep.subr.mxu0 0.0
        %932 = vmatpush1.msra.mxu0 %v548
        %933 = vmatprep.subr.mxu0 0.0
        %934 = vmatpush1.msra.mxu0 %v549
        %935 = vmatprep.subr.mxu0 0.0
        %936 = vmatpush1.msra.mxu0 %v550
        %937 = vmatprep.subr.mxu0 0.0
        %938 = vmatpush1.msra.mxu0 %v551
        %939 = vmatprep.subr.mxu0 0.0
        %940 = vmatpush1.msra.mxu0 %v552
        %941 = vmatprep.subr.mxu0 0.0
        %942 = vmatpush1.msra.mxu0 %v553
        %943 = vmatprep.subr.mxu0 0.0
        %944 = vmatpush1.msra.mxu0 %v554
        %945 = vmatprep.subr.mxu0 0.0
        %946 = vmatpush1.msra.mxu0 %v555
        %947 = vmatprep.subr.mxu0 0.0
        %948 = vmatpush1.msra.mxu0 %v556
        %949 = vmatprep.subr.mxu0 0.0
        %950 = vmatpush1.msra.mxu0 %v557
        %951 = vmatprep.subr.mxu0 0.0
        %952 = vmatpush1.msra.mxu0 %v558
        %953 = vmatprep.subr.mxu0 0.0
        %954 = vmatpush1.msra.mxu0 %v559
        %955 = vmatprep.subr.mxu0 0.0
        %956 = vmatpush1.msra.mxu0 %v560
        %957 = vmatprep.subr.mxu0 0.0
        %958 = vmatpush1.msra.mxu0 %v561
        %959 = vmatprep.subr.mxu0 0.0
        %960 = vmatpush1.msra.mxu0 %v562
        %961 = vmatprep.subr.mxu0 0.0
        %962 = vmatpush1.msra.mxu0 %v563
        %963 = vmatprep.subr.mxu0 0.0
        %964 = vmatpush1.msra.mxu0 %v564
        %965 = vmatprep.subr.mxu0 0.0
        %966 = vmatpush1.msra.mxu0 %v565
        %967 = vmatprep.subr.mxu0 0.0
        %968 = vmatpush1.msra.mxu0 %v566
        %969 = vmatprep.subr.mxu0 0.0
        %970 = vmatpush1.msra.mxu0 %v567
        %971 = vmatprep.subr.mxu0 0.0
        %972 = vmatpush1.msra.mxu0 %v568
        %973 = vmatprep.subr.mxu0 0.0
        %974 = vmatpush1.msra.mxu0 %v569
        %975 = vmatprep.subr.mxu0 0.0
        %976 = vmatpush1.msra.mxu0 %v570
        %977 = vmatprep.subr.mxu0 0.0
        %978 = vmatpush1.msra.mxu0 %v571
        %979 = vmatprep.subr.mxu0 0.0
        %980 = vmatpush1.msra.mxu0 %v572
        %981 = vmatprep.subr.mxu0 0.0
        %982 = vmatpush1.msra.mxu0 %v573
        %983 = vmatprep.subr.mxu0 0.0
        %984 = vmatpush1.msra.mxu0 %v574
        %985 = vmatprep.subr.mxu0 0.0
        %986 = vmatpush1.msra.mxu0 %v575
        %987 = vmatprep.subr.mxu0 0.0
        %988 = vmatpush1.msra.mxu0 %v576
        %989 = vmatprep.mubr.f32.mxu0 %v374
        %990 = vmatmul.mubr.f32.gmra.mrb[0].mxu0 %v373
        %v991 = vpop.f32.mrb[0].mxu0
        %v992 = vadd.f32 %v847, %v991
        %v993 = vpop.f32.mrb[0].mxu0
        %994 = vmatprep.mubr.f32.mxu0 %v381
        %995 = vmatmul.mubr.f32.gmra.mrb[0].mxu0 %v380
        %v996 = vpop.f32.mrb[0].mxu0
        %v997 = vadd.f32 %v852, %v996
        %v998 = vpop.f32.mrb[0].mxu0
        %999 = vmatprep.mubr.f32.mxu0 %v388
        %1000 = vmatmul.mubr.f32.gmra.mrb[0].mxu0 %v387
        %v1001 = vpop.f32.mrb[0].mxu0
        %v1002 = vadd.f32 %v857, %v1001
        %v1003 = vpop.f32.mrb[0].mxu0
        %1004 = vmatprep.mubr.f32.mxu0 %v395
        %1005 = vmatmul.mubr.f32.gmra.mrb[0].mxu0 %v394
        %v1006 = vpop.f32.mrb[0].mxu0
        %v1007 = vadd.f32 %v862, %v1006
        %v1008 = vpop.f32.mrb[0].mxu0
        %1009 = vmatprep.mubr.f32.mxu0 %v402
        %1010 = vmatmul.mubr.f32.gmra.mrb[0].mxu0 %v401
        %v1011 = vpop.f32.mrb[0].mxu0
        %v1012 = vadd.f32 %v867, %v1011
        %v1013 = vpop.f32.mrb[0].mxu0
        %1014 = vmatprep.mubr.f32.mxu0 %v409
        %1015 = vmatmul.mubr.f32.gmra.mrb[0].mxu0 %v408
        %v1016 = vpop.f32.mrb[0].mxu0
        %v1017 = vadd.f32 %v872, %v1016
        %v1018 = vpop.f32.mrb[0].mxu0
        %1019 = vmatprep.mubr.f32.mxu0 %v416
        %1020 = vmatmul.mubr.f32.gmra.mrb[0].mxu0 %v415
        %v1021 = vpop.f32.mrb[0].mxu0
        %v1022 = vadd.f32 %v877, %v1021
        %v1023 = vpop.f32.mrb[0].mxu0
        %1024 = vmatprep.mubr.f32.mxu0 %v423
        %1025 = vmatmul.mubr.f32.gmra.mrb[0].mxu0 %v422
        %v1026 = vpop.f32.mrb[0].mxu0
        %v1027 = vadd.f32 %v882, %v1026
        %v1028 = vpop.f32.mrb[0].mxu0
        %1029 = vmatprep.mubr.f32.mxu0 %v430
        %1030 = vmatmul.mubr.f32.gmra.mrb[0].mxu0 %v429
        %v1031 = vpop.f32.mrb[0].mxu0
        %v1032 = vadd.f32 %v887, %v1031
        %v1033 = vpop.f32.mrb[0].mxu0
        %1034 = vmatprep.mubr.f32.mxu0 %v437
        %1035 = vmatmul.mubr.f32.gmra.mrb[0].mxu0 %v436
        %v1036 = vpop.f32.mrb[0].mxu0
        %v1037 = vadd.f32 %v892, %v1036
        %v1038 = vpop.f32.mrb[0].mxu0
        %1039 = vmatprep.mubr.f32.mxu0 %v444
        %1040 = vmatmul.mubr.f32.gmra.mrb[0].mxu0 %v443
        %v1041 = vpop.f32.mrb[0].mxu0
        %v1042 = vadd.f32 %v897, %v1041
        %v1043 = vpop.f32.mrb[0].mxu0
        %1044 = vmatprep.mubr.f32.mxu0 %v451
        %1045 = vmatmul.mubr.f32.gmra.mrb[0].mxu0 %v450
        %v1046 = vpop.f32.mrb[0].mxu0
        %v1047 = vadd.f32 %v902, %v1046
        %v1048 = vpop.f32.mrb[0].mxu0
        %1049 = vmatprep.mubr.f32.mxu0 %v458
        %1050 = vmatmul.mubr.f32.gmra.mrb[0].mxu0 %v457
        %v1051 = vpop.f32.mrb[0].mxu0
        %v1052 = vadd.f32 %v907, %v1051
        %v1053 = vpop.f32.mrb[0].mxu0
        %1054 = vmatprep.mubr.f32.mxu0 %v465
        %1055 = vmatmul.mubr.f32.gmra.mrb[0].mxu0 %v464
        %v1056 = vpop.f32.mrb[0].mxu0
        %v1057 = vadd.f32 %v912, %v1056
        %v1058 = vpop.f32.mrb[0].mxu0
        %1059 = vmatprep.mubr.f32.mxu0 %v472
        %1060 = vmatmul.mubr.f32.gmra.mrb[0].mxu0 %v471
        %v1061 = vpop.f32.mrb[0].mxu0
        %v1062 = vadd.f32 %v917, %v1061
        %v1063 = vpop.f32.mrb[0].mxu0
        %1064 = vmatprep.mubr.f32.mxu0 %v479
        %1065 = vmatmul.mubr.f32.gmra.mrb[0].mxu0 %v478
        %v1066 = vpop.f32.mrb[0].mxu0
        %v1067 = vadd.f32 %v922, %v1066
        %v1068 = vpop.f32.mrb[0].mxu0
        %1069 = vdwg.mxu0
        %1070 = vmatprep.subr.mxu0 0.0
        %1071 = vmatpush1.msra.mxu0 %v577
        %1072 = vmatprep.subr.mxu0 0.0
        %1073 = vmatpush1.msra.mxu0 %v578
        %1074 = vmatprep.subr.mxu0 0.0
        %1075 = vmatpush1.msra.mxu0 0.0
        %1076 = vmatprep.subr.mxu0 0.0
        %1077 = vmatpush1.msra.mxu0 0.0
        %1078 = vmatprep.subr.mxu0 0.0
        %1079 = vmatpush1.msra.mxu0 0.0
        %1080 = vmatprep.subr.mxu0 0.0
        %1081 = vmatpush1.msra.mxu0 0.0
        %1082 = vmatprep.subr.mxu0 0.0
        %1083 = vmatpush1.msra.mxu0 0.0
        %1084 = vmatprep.subr.mxu0 0.0
        %1085 = vmatpush1.msra.mxu0 0.0
        %1086 = vmatprep.subr.mxu0 0.0
        %1087 = vmatpush1.msra.mxu0 0.0
        %1088 = vmatprep.subr.mxu0 0.0
        %1089 = vmatpush1.msra.mxu0 0.0
        %1090 = vmatprep.subr.mxu0 0.0
        %1091 = vmatpush1.msra.mxu0 0.0
        %1092 = vmatprep.subr.mxu0 0.0
        %1093 = vmatpush1.msra.mxu0 0.0
        %1094 = vmatprep.subr.mxu0 0.0
        %1095 = vmatpush1.msra.mxu0 0.0
        %1096 = vmatprep.subr.mxu0 0.0
        %1097 = vmatpush1.msra.mxu0 0.0
        %1098 = vmatprep.subr.mxu0 0.0
        %1099 = vmatpush1.msra.mxu0 0.0
        %1100 = vmatprep.subr.mxu0 0.0
        %1101 = vmatpush1.msra.mxu0 0.0
        %1102 = vmatprep.subr.mxu0 0.0
        %1103 = vmatpush1.msra.mxu0 0.0
        %1104 = vmatprep.subr.mxu0 0.0
        %1105 = vmatpush1.msra.mxu0 0.0
        %1106 = vmatprep.subr.mxu0 0.0
        %1107 = vmatpush1.msra.mxu0 0.0
        %1108 = vmatprep.subr.mxu0 0.0
        %1109 = vmatpush1.msra.mxu0 0.0
        %1110 = vmatprep.subr.mxu0 0.0
        %1111 = vmatpush1.msra.mxu0 0.0
        %1112 = vmatprep.subr.mxu0 0.0
        %1113 = vmatpush1.msra.mxu0 0.0
        %1114 = vmatprep.subr.mxu0 0.0
        %1115 = vmatpush1.msra.mxu0 0.0
        %1116 = vmatprep.subr.mxu0 0.0
        %1117 = vmatpush1.msra.mxu0 0.0
        %1118 = vmatprep.subr.mxu0 0.0
        %1119 = vmatpush1.msra.mxu0 0.0
        %1120 = vmatprep.subr.mxu0 0.0
        %1121 = vmatpush1.msra.mxu0 0.0
        %1122 = vmatprep.subr.mxu0 0.0
        %1123 = vmatpush1.msra.mxu0 0.0
        %1124 = vmatprep.subr.mxu0 0.0
        %1125 = vmatpush1.msra.mxu0 0.0
        %1126 = vmatprep.subr.mxu0 0.0
        %1127 = vmatpush1.msra.mxu0 0.0
        %1128 = vmatprep.subr.mxu0 0.0
        %1129 = vmatpush1.msra.mxu0 0.0
        %1130 = vmatprep.subr.mxu0 0.0
        %1131 = vmatpush1.msra.mxu0 0.0
        %1132 = vmatprep.subr.mxu0 0.0
        %1133 = vmatpush1.msra.mxu0 0.0
        %1134 = vmatprep.mubr.f32.mxu0 0.0
        %1135 = vmatmul.mubr.f32.gmra.mrb[0].mxu0 %v588
        %v1136 = vpop.f32.mrb[0].mxu0
        %v1137 = vadd.f32 %v992, %v1136
        %v1138 = vpop.f32.mrb[0].mxu0
        %1139 = vmatprep.mubr.f32.mxu0 0.0
        %1140 = vmatmul.mubr.f32.gmra.mrb[0].mxu0 %v591
        %v1141 = vpop.f32.mrb[0].mxu0
        %v1142 = vadd.f32 %v997, %v1141
        %v1143 = vpop.f32.mrb[0].mxu0
        %1144 = vmatprep.mubr.f32.mxu0 0.0
        %1145 = vmatmul.mubr.f32.gmra.mrb[0].mxu0 %v594
        %v1146 = vpop.f32.mrb[0].mxu0
        %v1147 = vadd.f32 %v1002, %v1146
        %v1148 = vpop.f32.mrb[0].mxu0
        %1149 = vmatprep.mubr.f32.mxu0 0.0
        %1150 = vmatmul.mubr.f32.gmra.mrb[0].mxu0 %v597
        %v1151 = vpop.f32.mrb[0].mxu0
        %v1152 = vadd.f32 %v1007, %v1151
        %v1153 = vpop.f32.mrb[0].mxu0
        %1154 = vmatprep.mubr.f32.mxu0 0.0
        %1155 = vmatmul.mubr.f32.gmra.mrb[0].mxu0 %v600
        %v1156 = vpop.f32.mrb[0].mxu0
        %v1157 = vadd.f32 %v1012, %v1156
        %v1158 = vpop.f32.mrb[0].mxu0
        %1159 = vmatprep.mubr.f32.mxu0 0.0
        %1160 = vmatmul.mubr.f32.gmra.mrb[0].mxu0 %v603
        %v1161 = vpop.f32.mrb[0].mxu0
        %v1162 = vadd.f32 %v1017, %v1161
        %v1163 = vpop.f32.mrb[0].mxu0
        %1164 = vmatprep.mubr.f32.mxu0 0.0
        %1165 = vmatmul.mubr.f32.gmra.mrb[0].mxu0 %v606
        %v1166 = vpop.f32.mrb[0].mxu0
        %v1167 = vadd.f32 %v1022, %v1166
        %v1168 = vpop.f32.mrb[0].mxu0
        %1169 = vmatprep.mubr.f32.mxu0 0.0
        %1170 = vmatmul.mubr.f32.gmra.mrb[0].mxu0 %v609
        %v1171 = vpop.f32.mrb[0].mxu0
        %v1172 = vadd.f32 %v1027, %v1171
        %v1173 = vpop.f32.mrb[0].mxu0
        %1174 = vmatprep.mubr.f32.mxu0 0.0
        %1175 = vmatmul.mubr.f32.gmra.mrb[0].mxu0 %v612
        %v1176 = vpop.f32.mrb[0].mxu0
        %v1177 = vadd.f32 %v1032, %v1176
        %v1178 = vpop.f32.mrb[0].mxu0
        %1179 = vmatprep.mubr.f32.mxu0 0.0
        %1180 = vmatmul.mubr.f32.gmra.mrb[0].mxu0 %v615
        %v1181 = vpop.f32.mrb[0].mxu0
        %v1182 = vadd.f32 %v1037, %v1181
        %v1183 = vpop.f32.mrb[0].mxu0
        %1184 = vmatprep.mubr.f32.mxu0 0.0
        %1185 = vmatmul.mubr.f32.gmra.mrb[0].mxu0 %v618
        %v1186 = vpop.f32.mrb[0].mxu0
        %v1187 = vadd.f32 %v1042, %v1186
        %v1188 = vpop.f32.mrb[0].mxu0
        %1189 = vmatprep.mubr.f32.mxu0 0.0
        %1190 = vmatmul.mubr.f32.gmra.mrb[0].mxu0 %v621
        %v1191 = vpop.f32.mrb[0].mxu0
        %v1192 = vadd.f32 %v1047, %v1191
        %v1193 = vpop.f32.mrb[0].mxu0
        %1194 = vmatprep.mubr.f32.mxu0 0.0
        %1195 = vmatmul.mubr.f32.gmra.mrb[0].mxu0 %v624
        %v1196 = vpop.f32.mrb[0].mxu0
        %v1197 = vadd.f32 %v1052, %v1196
        %v1198 = vpop.f32.mrb[0].mxu0
        %1199 = vmatprep.mubr.f32.mxu0 0.0
        %1200 = vmatmul.mubr.f32.gmra.mrb[0].mxu0 %v627
        %v1201 = vpop.f32.mrb[0].mxu0
        %v1202 = vadd.f32 %v1057, %v1201
        %v1203 = vpop.f32.mrb[0].mxu0
        %1204 = vmatprep.mubr.f32.mxu0 0.0
        %1205 = vmatmul.mubr.f32.gmra.mrb[0].mxu0 %v630
        %v1206 = vpop.f32.mrb[0].mxu0
        %v1207 = vadd.f32 %v1062, %v1206
        %v1208 = vpop.f32.mrb[0].mxu0
        %1209 = vmatprep.mubr.f32.mxu0 0.0
        %1210 = vmatmul.mubr.f32.gmra.mrb[0].mxu0 %v633
        %v1211 = vpop.f32.mrb[0].mxu0
        %v1212 = vadd.f32 %v1067, %v1211
        %v1213 = vpop.f32.mrb[0].mxu0
        %1214 = vdwg.mxu0
        %v1215 = vsub.f32 0.0, %v1137
        %v1216 = vsub.f32 0.0, %v1142
        %v1217 = vsub.f32 0.0, %v1147
        %v1218 = vsub.f32 0.0, %v1152
        %v1219 = vsub.f32 0.0, %v1157
        %v1220 = vsub.f32 0.0, %v1162
        %v1221 = vsub.f32 0.0, %v1167
        %v1222 = vsub.f32 0.0, %v1172
        %v1223 = vsub.f32 0.0, %v1177
        %v1224 = vsub.f32 0.0, %v1182
        %v1225 = vsub.f32 0.0, %v1187
        %v1226 = vsub.f32 0.0, %v1192
        %v1227 = vsub.f32 0.0, %v1197
        %v1228 = vsub.f32 0.0, %v1202
        %v1229 = vsub.f32 0.0, %v1207
        %v1230 = vsub.f32 0.0, %v1212
        %v1231 = vmul.f32 %v1215, 1.442695
        %v1232 = vpow.pop %v1231
        %v1233 = vmul.f32 %v1216, 1.442695
        %v1234 = vpow.pop %v1233
        %v1235 = vmul.f32 %v1217, 1.442695
        %v1236 = vpow.pop %v1235
        %v1237 = vmul.f32 %v1218, 1.442695
        %v1238 = vpow.pop %v1237
        %v1239 = vmul.f32 %v1219, 1.442695
        %v1240 = vpow.pop %v1239
        %v1241 = vmul.f32 %v1220, 1.442695
        %v1242 = vpow.pop %v1241
        %v1243 = vmul.f32 %v1221, 1.442695
        %v1244 = vpow.pop %v1243
        %v1245 = vmul.f32 %v1222, 1.442695
        %v1246 = vpow.pop %v1245
        %v1247 = vmul.f32 %v1223, 1.442695
        %v1248 = vpow.pop %v1247
        %v1249 = vmul.f32 %v1224, 1.442695
        %v1250 = vpow.pop %v1249
        %v1251 = vmul.f32 %v1225, 1.442695
        %v1252 = vpow.pop %v1251
        %v1253 = vmul.f32 %v1226, 1.442695
        %v1254 = vpow.pop %v1253
        %v1255 = vmul.f32 %v1227, 1.442695
        %v1256 = vpow.pop %v1255
        %v1257 = vmul.f32 %v1228, 1.442695
        %v1258 = vpow.pop %v1257
        %v1259 = vmul.f32 %v1229, 1.442695
        %v1260 = vpow.pop %v1259
        %v1261 = vmul.f32 %v1230, 1.442695
        %v1262 = vpow.pop %v1261
        %v1263 = vadd.f32 %v1232, 1.0
        %v1264 = vadd.f32 %v1234, 1.0
        %v1265 = vadd.f32 %v1236, 1.0
        %v1266 = vadd.f32 %v1238, 1.0
        %v1267 = vadd.f32 %v1240, 1.0
        %v1268 = vadd.f32 %v1242, 1.0
        %v1269 = vadd.f32 %v1244, 1.0
        %v1270 = vadd.f32 %v1246, 1.0
        %v1271 = vadd.f32 %v1248, 1.0
        %v1272 = vadd.f32 %v1250, 1.0
        %v1273 = vadd.f32 %v1252, 1.0
        %v1274 = vadd.f32 %v1254, 1.0
        %v1275 = vadd.f32 %v1256, 1.0
        %v1276 = vadd.f32 %v1258, 1.0
        %v1277 = vadd.f32 %v1260, 1.0
        %v1278 = vadd.f32 %v1262, 1.0
        %v1279 = vrcp.pop %v1263
        %v1280 = vrcp.pop %v1264
        %v1281 = vrcp.pop %v1265
        %v1282 = vrcp.pop %v1266
        %v1283 = vrcp.pop %v1267
        %v1284 = vrcp.pop %v1268
        %v1285 = vrcp.pop %v1269
        %v1286 = vrcp.pop %v1270
        %v1287 = vrcp.pop %v1271
        %v1288 = vrcp.pop %v1272
        %v1289 = vrcp.pop %v1273
        %v1290 = vrcp.pop %v1274
        %v1291 = vrcp.pop %v1275
        %v1292 = vrcp.pop %v1276
        %v1293 = vrcp.pop %v1277
        %v1294 = vrcp.pop %v1278
        %v1295 = vld [vmem:[#allocation9] sm:$0xff]
        %v1296 = vld [vmem:[#allocation9 + $0x8] sm:$0xff]
        %v1297 = vld [vmem:[#allocation9 + $0x10] sm:$0xff]
        %v1298 = vld [vmem:[#allocation9 + $0x18] sm:$0xff]
        %v1299 = vld [vmem:[#allocation11] sm:$0x1]
        %v1301 = vlaneseq
        %v1302 = vshrl.u32 %v1301, 7
        %v1303 = vsub.s32 0, %v1302
        %v1304 = vrot.slane %v1299, %v1303
        %vm1306 = vcmask 261120
        %v1308 = vsel %vm1306, %v1279, 0
        %v1311 = vsel %vm1306, %v1280, 0
        %v1314 = vsel %vm1306, %v1281, 0
        %v1317 = vsel %vm1306, %v1282, 0
        %v1320 = vsel %vm1306, %v1283, 0
        %v1323 = vsel %vm1306, %v1284, 0
        %v1326 = vsel %vm1306, %v1285, 0
        %v1329 = vsel %vm1306, %v1286, 0
        %v1332 = vsel %vm1306, %v1287, 0
        %v1335 = vsel %vm1306, %v1288, 0
        %v1338 = vsel %vm1306, %v1289, 0
        %v1341 = vsel %vm1306, %v1290, 0
        %v1344 = vsel %vm1306, %v1291, 0
        %v1347 = vsel %vm1306, %v1292, 0
        %v1350 = vsel %vm1306, %v1293, 0
        %v1353 = vsel %vm1306, %v1294, 0
        %1355 = vmatprep.subr.mxu0 0.0
        %1356 = vmatpush1.msra.mxu0 %v1295
        %1357 = vmatprep.subr.mxu0 0.0
        %1358 = vmatpush1.msra.mxu0 %v1296
        %1359 = vmatprep.subr.mxu0 0.0
        %1360 = vmatpush1.msra.mxu0 %v1297
        %1361 = vmatprep.subr.mxu0 0.0
        %1362 = vmatpush1.msra.mxu0 %v1298
        %1363 = vmatprep.subr.mxu0 0.0
        %1364 = vmatpush1.msra.mxu0 0.0
        %1365 = vmatprep.subr.mxu0 0.0
        %1366 = vmatpush1.msra.mxu0 0.0
        %1367 = vmatprep.subr.mxu0 0.0
        %1368 = vmatpush1.msra.mxu0 0.0
        %1369 = vmatprep.subr.mxu0 0.0
        %1370 = vmatpush1.msra.mxu0 0.0
        %1371 = vmatprep.subr.mxu0 0.0
        %1372 = vmatpush1.msra.mxu0 0.0
        %1373 = vmatprep.subr.mxu0 0.0
        %1374 = vmatpush1.msra.mxu0 0.0
        %1375 = vmatprep.subr.mxu0 0.0
        %1376 = vmatpush1.msra.mxu0 0.0
        %1377 = vmatprep.subr.mxu0 0.0
        %1378 = vmatpush1.msra.mxu0 0.0
        %1379 = vmatprep.subr.mxu0 0.0
        %1380 = vmatpush1.msra.mxu0 0.0
        %1381 = vmatprep.subr.mxu0 0.0
        %1382 = vmatpush1.msra.mxu0 0.0
        %1383 = vmatprep.subr.mxu0 0.0
        %1384 = vmatpush1.msra.mxu0 0.0
        %1385 = vmatprep.subr.mxu0 0.0
        %1386 = vmatpush1.msra.mxu0 0.0
        %1387 = vmatprep.subr.mxu0 0.0
        %1388 = vmatpush1.msra.mxu0 0.0
        %1389 = vmatprep.subr.mxu0 0.0
        %1390 = vmatpush1.msra.mxu0 0.0
        %1391 = vmatprep.subr.mxu0 0.0
        %1392 = vmatpush1.msra.mxu0 0.0
        %1393 = vmatprep.subr.mxu0 0.0
        %1394 = vmatpush1.msra.mxu0 0.0
        %1395 = vmatprep.subr.mxu0 0.0
        %1396 = vmatpush1.msra.mxu0 0.0
        %1397 = vmatprep.subr.mxu0 0.0
        %1398 = vmatpush1.msra.mxu0 0.0
        %1399 = vmatprep.subr.mxu0 0.0
        %1400 = vmatpush1.msra.mxu0 0.0
        %1401 = vmatprep.subr.mxu0 0.0
        %1402 = vmatpush1.msra.mxu0 0.0
        %1403 = vmatprep.subr.mxu0 0.0
        %1404 = vmatpush1.msra.mxu0 0.0
        %1405 = vmatprep.subr.mxu0 0.0
        %1406 = vmatpush1.msra.mxu0 0.0
        %1407 = vmatprep.subr.mxu0 0.0
        %1408 = vmatpush1.msra.mxu0 0.0
        %1409 = vmatprep.subr.mxu0 0.0
        %1410 = vmatpush1.msra.mxu0 0.0
        %1411 = vmatprep.subr.mxu0 0.0
        %1412 = vmatpush1.msra.mxu0 0.0
        %1413 = vmatprep.subr.mxu0 0.0
        %1414 = vmatpush1.msra.mxu0 0.0
        %1415 = vmatprep.subr.mxu0 0.0
        %1416 = vmatpush1.msra.mxu0 0.0
        %1417 = vmatprep.subr.mxu0 0.0
        %1418 = vmatpush1.msra.mxu0 0.0
        %1419 = vmatprep.mubr.f32.mxu0 0.0
        %1420 = vmatmul.mubr.f32.gmra.mrb[0].mxu0 %v1308
        %v1421 = vpop.f32.mrb[0].mxu0
        %v1422 = vadd.f32 %v1304, %v1421
        %v1423 = vpop.f32.mrb[0].mxu0
        %1424 = vmatprep.mubr.f32.mxu0 0.0
        %1425 = vmatmul.mubr.f32.gmra.mrb[0].mxu0 %v1311
        %v1426 = vpop.f32.mrb[0].mxu0
        %v1427 = vadd.f32 %v1304, %v1426
        %v1428 = vpop.f32.mrb[0].mxu0
        %1429 = vmatprep.mubr.f32.mxu0 0.0
        %1430 = vmatmul.mubr.f32.gmra.mrb[0].mxu0 %v1314
        %v1431 = vpop.f32.mrb[0].mxu0
        %v1432 = vadd.f32 %v1304, %v1431
        %v1433 = vpop.f32.mrb[0].mxu0
        %1434 = vmatprep.mubr.f32.mxu0 0.0
        %1435 = vmatmul.mubr.f32.gmra.mrb[0].mxu0 %v1317
        %v1436 = vpop.f32.mrb[0].mxu0
        %v1437 = vadd.f32 %v1304, %v1436
        %v1438 = vpop.f32.mrb[0].mxu0
        %1439 = vmatprep.mubr.f32.mxu0 0.0
        %1440 = vmatmul.mubr.f32.gmra.mrb[0].mxu0 %v1320
        %v1441 = vpop.f32.mrb[0].mxu0
        %v1442 = vadd.f32 %v1304, %v1441
        %v1443 = vpop.f32.mrb[0].mxu0
        %1444 = vmatprep.mubr.f32.mxu0 0.0
        %1445 = vmatmul.mubr.f32.gmra.mrb[0].mxu0 %v1323
        %v1446 = vpop.f32.mrb[0].mxu0
        %v1447 = vadd.f32 %v1304, %v1446
        %v1448 = vpop.f32.mrb[0].mxu0
        %1449 = vmatprep.mubr.f32.mxu0 0.0
        %1450 = vmatmul.mubr.f32.gmra.mrb[0].mxu0 %v1326
        %v1451 = vpop.f32.mrb[0].mxu0
        %v1452 = vadd.f32 %v1304, %v1451
        %v1453 = vpop.f32.mrb[0].mxu0
        %1454 = vmatprep.mubr.f32.mxu0 0.0
        %1455 = vmatmul.mubr.f32.gmra.mrb[0].mxu0 %v1329
        %v1456 = vpop.f32.mrb[0].mxu0
        %v1457 = vadd.f32 %v1304, %v1456
        %v1458 = vpop.f32.mrb[0].mxu0
        %1459 = vmatprep.mubr.f32.mxu0 0.0
        %1460 = vmatmul.mubr.f32.gmra.mrb[0].mxu0 %v1332
        %v1461 = vpop.f32.mrb[0].mxu0
        %v1462 = vadd.f32 %v1304, %v1461
        %v1463 = vpop.f32.mrb[0].mxu0
        %1464 = vmatprep.mubr.f32.mxu0 0.0
        %1465 = vmatmul.mubr.f32.gmra.mrb[0].mxu0 %v1335
        %v1466 = vpop.f32.mrb[0].mxu0
        %v1467 = vadd.f32 %v1304, %v1466
        %v1468 = vpop.f32.mrb[0].mxu0
        %1469 = vmatprep.mubr.f32.mxu0 0.0
        %1470 = vmatmul.mubr.f32.gmra.mrb[0].mxu0 %v1338
        %v1471 = vpop.f32.mrb[0].mxu0
        %v1472 = vadd.f32 %v1304, %v1471
        %v1473 = vpop.f32.mrb[0].mxu0
        %1474 = vmatprep.mubr.f32.mxu0 0.0
        %1475 = vmatmul.mubr.f32.gmra.mrb[0].mxu0 %v1341
        %v1476 = vpop.f32.mrb[0].mxu0
        %v1477 = vadd.f32 %v1304, %v1476
        %v1478 = vpop.f32.mrb[0].mxu0
        %1479 = vmatprep.mubr.f32.mxu0 0.0
        %1480 = vmatmul.mubr.f32.gmra.mrb[0].mxu0 %v1344
        %v1481 = vpop.f32.mrb[0].mxu0
        %v1482 = vadd.f32 %v1304, %v1481
        %v1483 = vpop.f32.mrb[0].mxu0
        %1484 = vmatprep.mubr.f32.mxu0 0.0
        %1485 = vmatmul.mubr.f32.gmra.mrb[0].mxu0 %v1347
        %v1486 = vpop.f32.mrb[0].mxu0
        %v1487 = vadd.f32 %v1304, %v1486
        %v1488 = vpop.f32.mrb[0].mxu0
        %1489 = vmatprep.mubr.f32.mxu0 0.0
        %1490 = vmatmul.mubr.f32.gmra.mrb[0].mxu0 %v1350
        %v1491 = vpop.f32.mrb[0].mxu0
        %v1492 = vadd.f32 %v1304, %v1491
        %v1493 = vpop.f32.mrb[0].mxu0
        %1494 = vmatprep.mubr.f32.mxu0 0.0
        %1495 = vmatmul.mubr.f32.gmra.mrb[0].mxu0 %v1353
        %v1496 = vpop.f32.mrb[0].mxu0
        %v1497 = vadd.f32 %v1304, %v1496
        %v1498 = vpop.f32.mrb[0].mxu0
        %1499 = vdwg.mxu0
        %v1500 = vsub.f32 0.0, %v1422
        %v1501 = vsub.f32 0.0, %v1427
        %v1502 = vsub.f32 0.0, %v1432
        %v1503 = vsub.f32 0.0, %v1437
        %v1504 = vsub.f32 0.0, %v1442
        %v1505 = vsub.f32 0.0, %v1447
        %v1506 = vsub.f32 0.0, %v1452
        %v1507 = vsub.f32 0.0, %v1457
        %v1508 = vsub.f32 0.0, %v1462
        %v1509 = vsub.f32 0.0, %v1467
        %v1510 = vsub.f32 0.0, %v1472
        %v1511 = vsub.f32 0.0, %v1477
        %v1512 = vsub.f32 0.0, %v1482
        %v1513 = vsub.f32 0.0, %v1487
        %v1514 = vsub.f32 0.0, %v1492
        %v1515 = vsub.f32 0.0, %v1497
        %v1516 = vmul.f32 %v1500, 1.442695
        %v1517 = vpow.pop %v1516
        %v1518 = vmul.f32 %v1501, 1.442695
        %v1519 = vpow.pop %v1518
        %v1520 = vmul.f32 %v1502, 1.442695
        %v1521 = vpow.pop %v1520
        %v1522 = vmul.f32 %v1503, 1.442695
        %v1523 = vpow.pop %v1522
        %v1524 = vmul.f32 %v1504, 1.442695
        %v1525 = vpow.pop %v1524
        %v1526 = vmul.f32 %v1505, 1.442695
        %v1527 = vpow.pop %v1526
        %v1528 = vmul.f32 %v1506, 1.442695
        %v1529 = vpow.pop %v1528
        %v1530 = vmul.f32 %v1507, 1.442695
        %v1531 = vpow.pop %v1530
        %v1532 = vmul.f32 %v1508, 1.442695
        %v1533 = vpow.pop %v1532
        %v1534 = vmul.f32 %v1509, 1.442695
        %v1535 = vpow.pop %v1534
        %v1536 = vmul.f32 %v1510, 1.442695
        %v1537 = vpow.pop %v1536
        %v1538 = vmul.f32 %v1511, 1.442695
        %v1539 = vpow.pop %v1538
        %v1540 = vmul.f32 %v1512, 1.442695
        %v1541 = vpow.pop %v1540
        %v1542 = vmul.f32 %v1513, 1.442695
        %v1543 = vpow.pop %v1542
        %v1544 = vmul.f32 %v1514, 1.442695
        %v1545 = vpow.pop %v1544
        %v1546 = vmul.f32 %v1515, 1.442695
        %v1547 = vpow.pop %v1546
        %v1548 = vadd.f32 %v1517, 1.0
        %v1549 = vadd.f32 %v1519, 1.0
        %v1550 = vadd.f32 %v1521, 1.0
        %v1551 = vadd.f32 %v1523, 1.0
        %v1552 = vadd.f32 %v1525, 1.0
        %v1553 = vadd.f32 %v1527, 1.0
        %v1554 = vadd.f32 %v1529, 1.0
        %v1555 = vadd.f32 %v1531, 1.0
        %v1556 = vadd.f32 %v1533, 1.0
        %v1557 = vadd.f32 %v1535, 1.0
        %v1558 = vadd.f32 %v1537, 1.0
        %v1559 = vadd.f32 %v1539, 1.0
        %v1560 = vadd.f32 %v1541, 1.0
        %v1561 = vadd.f32 %v1543, 1.0
        %v1562 = vadd.f32 %v1545, 1.0
        %v1563 = vadd.f32 %v1547, 1.0
        %v1564 = vrcp.pop %v1548
        %v1565 = vrcp.pop %v1549
        %v1566 = vrcp.pop %v1550
        %v1567 = vrcp.pop %v1551
        %v1568 = vrcp.pop %v1552
        %v1569 = vrcp.pop %v1553
        %v1570 = vrcp.pop %v1554
        %v1571 = vrcp.pop %v1555
        %v1572 = vrcp.pop %v1556
        %v1573 = vrcp.pop %v1557
        %v1574 = vrcp.pop %v1558
        %v1575 = vrcp.pop %v1559
        %v1576 = vrcp.pop %v1560
        %v1577 = vrcp.pop %v1561
        %v1578 = vrcp.pop %v1562
        %v1579 = vrcp.pop %v1563
        %v1580 = vld [vmem:[#allocation12] sm:$0x1]
        %v1582 = vlaneseq
        %v1583 = vshrl.u32 %v1582, 7
        %v1584 = vsub.s32 0, %v1583
        %v1585 = vrot.slane %v1580, %v1584
        %v1587 = vmul.f32 %v1564, %v1585
        %v1588 = vmul.f32 %v1565, %v1585
        %v1589 = vmul.f32 %v1566, %v1585
        %v1590 = vmul.f32 %v1567, %v1585
        %v1591 = vmul.f32 %v1568, %v1585
        %v1592 = vmul.f32 %v1569, %v1585
        %v1593 = vmul.f32 %v1570, %v1585
        %v1594 = vmul.f32 %v1571, %v1585
        %v1595 = vmul.f32 %v1572, %v1585
        %v1596 = vmul.f32 %v1573, %v1585
        %v1597 = vmul.f32 %v1574, %v1585
        %v1598 = vmul.f32 %v1575, %v1585
        %v1599 = vmul.f32 %v1576, %v1585
        %v1600 = vmul.f32 %v1577, %v1585
        %v1601 = vmul.f32 %v1578, %v1585
        %v1602 = vmul.f32 %v1579, %v1585
        %vm1603 = vcmask 523264
        %v1604 = vsel %vm1603, %v1587, 0.0
        %1605 = vadd.xlane.f32.xlu0 %v1604
        %v1606 = vpop.xlane.xlu0 %1605
        %v1607 = vsel %vm1603, %v1588, 0.0
        %1608 = vadd.xlane.f32.xlu0 %v1607
        %v1609 = vpop.xlane.xlu0 %1608
        %v1610 = vsel %vm1603, %v1589, 0.0
        %1611 = vadd.xlane.f32.xlu0 %v1610
        %v1612 = vpop.xlane.xlu0 %1611
        %v1613 = vsel %vm1603, %v1590, 0.0
        %1614 = vadd.xlane.f32.xlu0 %v1613
        %v1615 = vpop.xlane.xlu0 %1614
        %v1616 = vsel %vm1603, %v1591, 0.0
        %1617 = vadd.xlane.f32.xlu0 %v1616
        %v1618 = vpop.xlane.xlu0 %1617
        %v1619 = vsel %vm1603, %v1592, 0.0
        %1620 = vadd.xlane.f32.xlu0 %v1619
        %v1621 = vpop.xlane.xlu0 %1620
        %v1622 = vsel %vm1603, %v1593, 0.0
        %1623 = vadd.xlane.f32.xlu0 %v1622
        %v1624 = vpop.xlane.xlu0 %1623
        %v1625 = vsel %vm1603, %v1594, 0.0
        %1626 = vadd.xlane.f32.xlu0 %v1625
        %v1627 = vpop.xlane.xlu0 %1626
        %v1628 = vsel %vm1603, %v1595, 0.0
        %1629 = vadd.xlane.f32.xlu0 %v1628
        %v1630 = vpop.xlane.xlu0 %1629
        %v1631 = vsel %vm1603, %v1596, 0.0
        %1632 = vadd.xlane.f32.xlu0 %v1631
        %v1633 = vpop.xlane.xlu0 %1632
        %v1634 = vsel %vm1603, %v1597, 0.0
        %1635 = vadd.xlane.f32.xlu0 %v1634
        %v1636 = vpop.xlane.xlu0 %1635
        %v1637 = vsel %vm1603, %v1598, 0.0
        %1638 = vadd.xlane.f32.xlu0 %v1637
        %v1639 = vpop.xlane.xlu0 %1638
        %v1640 = vsel %vm1603, %v1599, 0.0
        %1641 = vadd.xlane.f32.xlu0 %v1640
        %v1642 = vpop.xlane.xlu0 %1641
        %v1643 = vsel %vm1603, %v1600, 0.0
        %1644 = vadd.xlane.f32.xlu0 %v1643
        %v1645 = vpop.xlane.xlu0 %1644
        %v1646 = vsel %vm1603, %v1601, 0.0
        %1647 = vadd.xlane.f32.xlu0 %v1646
        %v1648 = vpop.xlane.xlu0 %1647
        %v1649 = vsel %vm1603, %v1602, 0.0
        %1650 = vadd.xlane.f32.xlu0 %v1649
        %v1651 = vpop.xlane.xlu0 %1650
        %v1652 = vld [vmem:[#allocation2] sm:$0x1]
        %v1654 = vlaneseq
        %v1655 = vshrl.u32 %v1654, 7
        %v1656 = vsub.s32 0, %v1655
        %v1657 = vrot.slane %v1652, %v1656
        %v1659 = vadd.f32 %v1606, %v1657
        %v1660 = vadd.f32 %v1609, %v1657
        %v1661 = vadd.f32 %v1612, %v1657
        %v1662 = vadd.f32 %v1615, %v1657
        %v1663 = vadd.f32 %v1618, %v1657
        %v1664 = vadd.f32 %v1621, %v1657
        %v1665 = vadd.f32 %v1624, %v1657
        %v1666 = vadd.f32 %v1627, %v1657
        %v1667 = vadd.f32 %v1630, %v1657
        %v1668 = vadd.f32 %v1633, %v1657
        %v1669 = vadd.f32 %v1636, %v1657
        %v1670 = vadd.f32 %v1639, %v1657
        %v1671 = vadd.f32 %v1642, %v1657
        %v1672 = vadd.f32 %v1645, %v1657
        %v1673 = vadd.f32 %v1648, %v1657
        %v1674 = vadd.f32 %v1651, %v1657
        %v1675 = vsub.f32 0.0, %v1659
        %v1676 = vsub.f32 0.0, %v1660
        %v1677 = vsub.f32 0.0, %v1661
        %v1678 = vsub.f32 0.0, %v1662
        %v1679 = vsub.f32 0.0, %v1663
        %v1680 = vsub.f32 0.0, %v1664
        %v1681 = vsub.f32 0.0, %v1665
        %v1682 = vsub.f32 0.0, %v1666
        %v1683 = vsub.f32 0.0, %v1667
        %v1684 = vsub.f32 0.0, %v1668
        %v1685 = vsub.f32 0.0, %v1669
        %v1686 = vsub.f32 0.0, %v1670
        %v1687 = vsub.f32 0.0, %v1671
        %v1688 = vsub.f32 0.0, %v1672
        %v1689 = vsub.f32 0.0, %v1673
        %v1690 = vsub.f32 0.0, %v1674
        %v1691 = vmul.f32 %v1675, 1.442695
        %v1692 = vpow.pop %v1691
        %v1693 = vmul.f32 %v1676, 1.442695
        %v1694 = vpow.pop %v1693
        %v1695 = vmul.f32 %v1677, 1.442695
        %v1696 = vpow.pop %v1695
        %v1697 = vmul.f32 %v1678, 1.442695
        %v1698 = vpow.pop %v1697
        %v1699 = vmul.f32 %v1679, 1.442695
        %v1700 = vpow.pop %v1699
        %v1701 = vmul.f32 %v1680, 1.442695
        %v1702 = vpow.pop %v1701
        %v1703 = vmul.f32 %v1681, 1.442695
        %v1704 = vpow.pop %v1703
        %v1705 = vmul.f32 %v1682, 1.442695
        %v1706 = vpow.pop %v1705
        %v1707 = vmul.f32 %v1683, 1.442695
        %v1708 = vpow.pop %v1707
        %v1709 = vmul.f32 %v1684, 1.442695
        %v1710 = vpow.pop %v1709
        %v1711 = vmul.f32 %v1685, 1.442695
        %v1712 = vpow.pop %v1711
        %v1713 = vmul.f32 %v1686, 1.442695
        %v1714 = vpow.pop %v1713
        %v1715 = vmul.f32 %v1687, 1.442695
        %v1716 = vpow.pop %v1715
        %v1717 = vmul.f32 %v1688, 1.442695
        %v1718 = vpow.pop %v1717
        %v1719 = vmul.f32 %v1689, 1.442695
        %v1720 = vpow.pop %v1719
        %v1721 = vmul.f32 %v1690, 1.442695
        %v1722 = vpow.pop %v1721
        %v1723 = vadd.f32 %v1692, 1.0
        %v1724 = vadd.f32 %v1694, 1.0
        %v1725 = vadd.f32 %v1696, 1.0
        %v1726 = vadd.f32 %v1698, 1.0
        %v1727 = vadd.f32 %v1700, 1.0
        %v1728 = vadd.f32 %v1702, 1.0
        %v1729 = vadd.f32 %v1704, 1.0
        %v1730 = vadd.f32 %v1706, 1.0
        %v1731 = vadd.f32 %v1708, 1.0
        %v1732 = vadd.f32 %v1710, 1.0
        %v1733 = vadd.f32 %v1712, 1.0
        %v1734 = vadd.f32 %v1714, 1.0
        %v1735 = vadd.f32 %v1716, 1.0
        %v1736 = vadd.f32 %v1718, 1.0
        %v1737 = vadd.f32 %v1720, 1.0
        %v1738 = vadd.f32 %v1722, 1.0
        %v1739 = vrcp.pop %v1723
        %v1740 = vrcp.pop %v1724
        %v1741 = vrcp.pop %v1725
        %v1742 = vrcp.pop %v1726
        %v1743 = vrcp.pop %v1727
        %v1744 = vrcp.pop %v1728
        %v1745 = vrcp.pop %v1729
        %v1746 = vrcp.pop %v1730
        %v1747 = vrcp.pop %v1731
        %v1748 = vrcp.pop %v1732
        %v1749 = vrcp.pop %v1733
        %v1750 = vrcp.pop %v1734
        %v1751 = vrcp.pop %v1735
        %v1752 = vrcp.pop %v1736
        %v1753 = vrcp.pop %v1737
        %v1754 = vrcp.pop %v1738
        %vm1755 = vcmask 7168
        %1756 = vst.msk [vmem:[%s366] sm:$0xff] %vm1755, %v1739
        %1757 = vst.msk [vmem:[%s366 + $0x8] sm:$0xff] %vm1755, %v1740
        %1758 = vst.msk [vmem:[%s366 + $0x10] sm:$0xff] %vm1755, %v1741
        %1759 = vst.msk [vmem:[%s366 + $0x18] sm:$0xff] %vm1755, %v1742
        %1760 = vst.msk [vmem:[%s366 + $0x20] sm:$0xff] %vm1755, %v1743
        %1761 = vst.msk [vmem:[%s366 + $0x28] sm:$0xff] %vm1755, %v1744
        %1762 = vst.msk [vmem:[%s366 + $0x30] sm:$0xff] %vm1755, %v1745
        %1763 = vst.msk [vmem:[%s366 + $0x38] sm:$0xff] %vm1755, %v1746
        %1764 = vst.msk [vmem:[%s366 + $0x40] sm:$0xff] %vm1755, %v1747
        %1765 = vst.msk [vmem:[%s366 + $0x48] sm:$0xff] %vm1755, %v1748
        %1766 = vst.msk [vmem:[%s366 + $0x50] sm:$0xff] %vm1755, %v1749
        %1767 = vst.msk [vmem:[%s366 + $0x58] sm:$0xff] %vm1755, %v1750
        %1768 = vst.msk [vmem:[%s366 + $0x60] sm:$0xff] %vm1755, %v1751
        %1769 = vst.msk [vmem:[%s366 + $0x68] sm:$0xff] %vm1755, %v1752
        %1770 = vst.msk [vmem:[%s366 + $0x70] sm:$0xff] %vm1755, %v1753
        %1771 = vst.msk [vmem:[%s366 + $0x78] sm:$0xff] %vm1755, %v1754
        %s1772 = sand.u32 %s189, 1
        %s1773 = scalar_lea.sflag [#allocation5], %s1772
        %s1774 = sand.u32 %s189, 1
        %s1775 = smul.addr %s1774, 128
        %s1776 = scalar_lea.vmem [#allocation14], %s1775
        // Predicated region
        $region73: #{tpu_custom_call.1} parent=47 // pred_check
          %p1777 = pneg %p199
        $region74: #{tpu_custom_call.1} parent=47 // pred_check_branch
          %1779 = sbr.rel (%p1777) target = $region76
        $region75: #{tpu_custom_call.1} parent=47 // pred_region
          %s1780 = smul.u32 16, %s29
          %s1782 = ssub.s32 2048, 2048
          %1783 = vsyncadd %s1773, %s1782
          %s1784 = smul.addr %s1780, 128
          %s1785 = scalar_lea.hbm %s7, %s1784
          %s1786 = sshll.u32 %s1776, 4
          %s1787 = int_to_ptr.vmem [resolvable:$true] %s1786
          %1792 = dma.vmem_to_hbm [thread:$0]  %s1787, 2048, %s1785, %s1773, 128, 128, 8
        $region76: #{tpu_custom_call.1} parent=47 // pred_fallthru
          _
      $region48: #{tpu_custom_call.1} parent=5 // pred_fallthru
        _
      %p1793 = scmp.le.s32.totalorder 2, %s24
      // Predicated region
      $region77: #{tpu_custom_call.1} parent=5 // pred_check
        %p1794 = pneg %p1793
      $region78: #{tpu_custom_call.1} parent=5 // pred_check_branch
        %1796 = sbr.rel (%p1794) target = $region80
      $region79: #{tpu_custom_call.1} parent=5 // pred_region
        %s1797 = ssub.s32 %s24, 2
        // Predicated region
        $region81: #{tpu_custom_call.1} parent=79 // pred_check
          %p1798 = pneg %p205
        $region82: #{tpu_custom_call.1} parent=79 // pred_check_branch
          %1800 = sbr.rel (%p1798) target = $region84
        $region83: #{tpu_custom_call.1} parent=79 // pred_region
          %s1801 = sand.u32 %s190, 1
          %s1802 = scalar_lea.sflag [#allocation5], %s1801
          %s1803 = sand.u32 %s190, 1
          %s1804 = smul.addr %s1803, 128
          %s1805 = scalar_lea.vmem [#allocation14], %s1804
          %1806 = dma.done %s1802, 2048
        $region84: #{tpu_custom_call.1} parent=79 // pred_fallthru
          _
      $region80: #{tpu_custom_call.1} parent=5 // pred_fallthru
        _
    $region6: #{tpu_custom_call.1} parent=1 // loop_footer
      %s28 = sadd.s32 1, %s24
    $region7: #{tpu_custom_call.1} parent=1 // loop_footer_branch
      %23 = sbr.rel target = $region3
    $region8: #{tpu_custom_call.1} parent=1 // loop_exit
      _
    %1807 = vsyncpa [#allocation4], 1
    %s1808 = scalar_lea.sflag [#allocation4], 1
    %1809 = vsyncpa %s1808, 1
    %1810 = vsyncpa [#allocation7], 1
    %1811 = vsyncpa [#allocation10], 1
    %1812 = vsyncpa [#allocation13], 1
    %1813 = vsyncpa [#allocation5], 1
    %s1814 = scalar_lea.sflag [#allocation5], 1
    %1815 = vsyncpa %s1814, 1

</llo_original>
